<compile_context>
chip_gen: v6e
topology: v6e:2x2x1
jax: 0.10.0
libtpu: 0.0.40
codegen_flags: <defaults>
</compile_context>

<pallas_src>
import functools

import jax
import jax.numpy as jnp
from jax import lax
from jax.experimental import pallas as pl
from jax.experimental.pallas import tpu as pltpu


# ----------------------------------------------------------------------------
# Fused kernel: per-capsule 1x1 conv (bf16 MXU matmul) + folded BN affine
#               + max-pool over N + squash over capsules (epilogue)
# ----------------------------------------------------------------------------
def _caps_fused_kernel(x_ref, w_ref, scale_ref, shift_ref, o_ref, *, n_chunk):
    # x_ref:     (TB, Cin, N)   bf16, native NCW layout, resident across capsules
    # w_ref:     (Cin, Cout)    bf16, capsule j's 1x1-conv weight
    # scale_ref: (1, Cout)      f32, folded BN scale for capsule j
    # shift_ref: (1, Cout)      f32, folded conv-bias + BN shift for capsule j
    # o_ref:     (P, TB, Cout)  f32, resident across the capsule grid axis
    j = pl.program_id(1)
    tb = x_ref.shape[0]
    n = x_ref.shape[2]
    num_chunks = n // n_chunk

    w = w_ref[...]
    scale = scale_ref[...]          # (1, Cout)
    shift = shift_ref[...]          # (1, Cout)

    rows = []
    for t in range(tb):             # static unroll over the batch tile
        m = None
        for c in range(num_chunks):  # static unroll over N chunks (running max)
            xt = x_ref[t, :, c * n_chunk:(c + 1) * n_chunk]       # (Cin, NC) bf16
            y = lax.dot_general(                                   # (NC, Cout) f32
                xt, w,
                dimension_numbers=(((0,), (0,)), ((), ())),
                preferred_element_type=jnp.float32)
            y = y * scale + shift          # affine BEFORE max (scale may be < 0)
            cur = jnp.max(y, axis=0, keepdims=True)                # (1, Cout)
            m = cur if m is None else jnp.maximum(m, cur)
        rows.append(m)
    pooled = jnp.concatenate(rows, axis=0)                         # (TB, Cout)

    # Write this capsule's pooled row; o_ref accumulates all P capsules.
    o_ref[pl.ds(j, 1), :, :] = pooled[None]

    # Last capsule: squash over the capsule axis (axis 0 of the resident block).
    @pl.when(j == pl.num_programs(1) - 1)
    def _():
        u = o_ref[...]                                             # (P, TB, Cout)
        sq = jnp.sum(u * u, axis=0, keepdims=True)                 # (1, TB, Cout)
        # sq*u/((1+sq)*sqrt(sq)) == u*sqrt(sq)/(1+sq); the latter is 0-safe.
        o_ref[...] = u * jnp.sqrt(sq) * pl.reciprocal(1.0 + sq, approx=True)


# ----------------------------------------------------------------------------
# Module wrapper
# ----------------------------------------------------------------------------
@functools.partial(
    jax.jit, static_argnames=("prim_vec_size", "cout", "batch_tile", "n_chunk"))
def primary_point_caps_forward(x_ncw, w_all, scale, shift, *, prim_vec_size,
                               cout, batch_tile=None, n_chunk=256):
    # x_ncw: (B, Cin, N)  -- native PyTorch Conv1d layout, consumed as-is.
    B, cin, N = x_ncw.shape
    P = prim_vec_size
    assert w_all.shape == (cin, P * cout)

    tb = B if batch_tile is None else batch_tile
    assert B % tb == 0
    # Sublane constraint of the fused (P, TB, Cout) output block.
    assert tb == B or tb % 8 == 0

    nc = min(n_chunk, N)
    assert N % nc == 0

    # bf16 matmul operands (MXU native); BN affine + accumulation stay f32.
    x_bf = x_ncw.astype(jnp.bfloat16)
    w_bf = w_all.astype(jnp.bfloat16)

    kernel = functools.partial(_caps_fused_kernel, n_chunk=nc)
    out_pbc = pl.pallas_call(
        kernel,
        out_shape=jax.ShapeDtypeStruct((P, B, cout), jnp.float32),
        grid_spec=pltpu.PrefetchScalarGridSpec(
            num_scalar_prefetch=0,
            grid=(B // tb, P),                       # capsule axis innermost
            in_specs=[
                pl.BlockSpec((tb, cin, N), lambda bt, j: (bt, 0, 0)),   # x resident over j
                pl.BlockSpec((cin, cout), lambda bt, j: (0, j)),        # capsule j weights
                pl.BlockSpec((1, cout), lambda bt, j: (0, j)),          # BN scale
                pl.BlockSpec((1, cout), lambda bt, j: (0, j)),          # bias+BN shift
            ],
            out_specs=pl.BlockSpec((P, tb, cout), lambda bt, j: (0, bt, 0)),
        ),
        compiler_params=pltpu.CompilerParams(
            dimension_semantics=("parallel", "arbitrary"),
            vmem_limit_bytes=32 * 1024 * 1024,       # explicit, safe on v5e/v6e/v7x
        ),
    )(x_bf, w_bf, scale, shift)

    # (P, B, Cout) -> PyTorch (B, Cout, P); tiny glue transpose (B*Cout*P elems).
    return jnp.transpose(out_pbc, (1, 2, 0))


# ----------------------------------------------------------------------------
# Parameter folding (conv bias + eval-mode BN -> per-column scale/shift)
# ----------------------------------------------------------------------------
def make_params(key, cin, cout, prim_vec_size, eps=1e-5):
    ks = jax.random.split(key, 6)
    # Per-capsule Conv1d weight (Cout, Cin, 1) -> stored as (P, Cout, Cin)
    w = jax.random.normal(ks[0], (prim_vec_size, cout, cin), jnp.float32) * 0.05
    b = jax.random.normal(ks[1], (prim_vec_size, cout), jnp.float32) * 0.05
    gamma = 1.0 + 0.1 * jax.random.normal(ks[2], (prim_vec_size, cout), jnp.float32)
    beta = 0.1 * jax.random.normal(ks[3], (prim_vec_size, cout), jnp.float32)
    rmean = 0.05 * jax.random.normal(ks[4], (prim_vec_size, cout), jnp.float32)
    rvar = jnp.abs(jax.random.normal(ks[5], (prim_vec_size, cout), jnp.float32)) + 0.5

    # Concatenate capsule weights: W_all[cin, p*Cout + o] = w[p, o, cin]
    w_all = jnp.transpose(w, (2, 0, 1)).reshape(cin, prim_vec_size * cout)
    s = gamma / jnp.sqrt(rvar + eps)                 # BN scale
    shift = s * (b - rmean) + beta                   # conv bias + BN shift, folded
    scale_flat = s.reshape(1, prim_vec_size * cout)
    shift_flat = shift.reshape(1, prim_vec_size * cout)
    return w_all, scale_flat, shift_flat


# ----------------------------------------------------------------------------
# Pure-JAX reference (bf16-quantized inputs to match the kernel's matmul dtype)
# ----------------------------------------------------------------------------
def reference_forward(x_ncw, w_all, scale, shift, prim_vec_size, cout):
    xq = x_ncw.astype(jnp.bfloat16).astype(jnp.float32)
    wq = w_all.astype(jnp.bfloat16).astype(jnp.float32)
    x_bnc = jnp.transpose(xq, (0, 2, 1))                          # (B,N,Cin)
    y = jnp.einsum("bnc,ck->bnk", x_bnc, wq) * scale + shift      # (B,N,P*Cout)
    pooled = jnp.max(y, axis=1)                                   # (B,P*Cout)
    u = pooled.reshape(x_ncw.shape[0], prim_vec_size, cout)       # (B,P,Cout)
    u = jnp.transpose(u, (0, 2, 1))                               # (B,Cout,P)
    sq = jnp.sum(u * u, axis=-1, keepdims=True)
    return sq * u / ((1.0 + sq) * jnp.sqrt(sq))                   # PyTorch formula


if __name__ == "__main__":
    B, Cin, Cout, P = 2, 128, 1024, 8   # Cin/Cout/P fixed by the module's __init__
    N = 64                              # num_points (kept small for the test)

    key = jax.random.PRNGKey(0)
    kx, kp = jax.random.split(key)
    x = jax.random.normal(kx, (B, Cin, N), jnp.float32)           # PyTorch NCW input
    w_all, scale, shift = make_params(kp, Cin, Cout, P)

    out = primary_point_caps_forward(
        x, w_all, scale, shift,
        prim_vec_size=P, cout=Cout,
        batch_tile=B,      # single batch tile: W streamed once, 8 grid steps
    )
    out = jax.block_until_ready(out)

    ref = reference_forward(x, w_all, scale, shift, P, Cout)
    assert out.shape == (B, Cout, P), out.shape
    # Tolerance covers bf16 matmul accumulation-order differences and the EUP
    # approximate reciprocal in the squash epilogue.
    assert jnp.allclose(out, ref, atol=1e-2, rtol=1e-2), "mismatch vs reference"
    print("KERNEL_OK")
</pallas_src>

<mosaic_0001>
module attributes {stable_mosaic.version = 11 : i64} {
  func.func @_caps_fused_kernel(%arg0: i32, %arg1: i32, %arg2: memref<2x128x64xbf16, #tpu.memory_space<vmem>>, %arg3: memref<128x1024xbf16, #tpu.memory_space<vmem>>, %arg4: memref<1x1024xf32, #tpu.memory_space<vmem>>, %arg5: memref<1x1024xf32, #tpu.memory_space<vmem>>, %arg6: memref<8x2x1024xf32, #tpu.memory_space<vmem>>) attributes {dimension_semantics = [#tpu.dimension_semantics<parallel>, #tpu.dimension_semantics<arbitrary>], iteration_bounds = array<i64: 1, 8>, scalar_prefetch = 0 : i64, scratch_operands = 0 : i64, tpu.core_type = #tpu.core_type<tc>, window_params = [{transform_indices = @transform_0, window_bounds = array<i64: 2, 128, 64>}, {transform_indices = @transform_1, window_bounds = array<i64: 128, 1024>}, {transform_indices = @transform_2, window_bounds = array<i64: 1, 1024>}, {transform_indices = @transform_3, window_bounds = array<i64: 1, 1024>}, {transform_indices = @transform_4, window_bounds = array<i64: 8, 2, 1024>}]} {
    %c0 = arith.constant 0 : index
    %c0_0 = arith.constant 0 : index
    %0 = vector.load %arg3[%c0, %c0_0] : memref<128x1024xbf16, #tpu.memory_space<vmem>>, vector<128x1024xbf16>
    %c0_1 = arith.constant 0 : index
    %c0_2 = arith.constant 0 : index
    %1 = vector.load %arg4[%c0_1, %c0_2] : memref<1x1024xf32, #tpu.memory_space<vmem>>, vector<1x1024xf32>
    %c0_3 = arith.constant 0 : index
    %c0_4 = arith.constant 0 : index
    %2 = vector.load %arg5[%c0_3, %c0_4] : memref<1x1024xf32, #tpu.memory_space<vmem>>, vector<1x1024xf32>
    %c0_5 = arith.constant 0 : index
    %c0_6 = arith.constant 0 : index
    %c0_7 = arith.constant 0 : index
    %3 = vector.load %arg2[%c0_5, %c0_6, %c0_7] : memref<2x128x64xbf16, #tpu.memory_space<vmem>>, vector<1x128x64xbf16>
    %4 = vector.shape_cast %3 : vector<1x128x64xbf16> to vector<128x64xbf16>
    %cst = arith.constant dense<0.000000e+00> : vector<64x1024xf32>
    %5 = tpu.matmul %4, %0, %cst {dimension_numbers = #tpu.dot_dimension_numbers<[0], [0], [1], [1], [0, 1, 1, 1], [], []>} : vector<128x64xbf16>, vector<128x1024xbf16>, vector<64x1024xf32> -> vector<64x1024xf32>
    %6 = vector.broadcast %1 : vector<1x1024xf32> to vector<64x1024xf32>
    %7 = arith.mulf %5, %6 : vector<64x1024xf32>
    %8 = vector.broadcast %2 : vector<1x1024xf32> to vector<64x1024xf32>
    %9 = arith.addf %7, %8 : vector<64x1024xf32>
    %cst_8 = arith.constant dense<0xFF800000> : vector<1024xf32>
    %10 = vector.multi_reduction <maximumf>, %9, %cst_8 [0] : vector<64x1024xf32> to vector<1024xf32>
    %11 = vector.shape_cast %10 : vector<1024xf32> to vector<1x1024xf32>
    %c1 = arith.constant 1 : index
    %c0_9 = arith.constant 0 : index
    %c0_10 = arith.constant 0 : index
    %12 = vector.load %arg2[%c1, %c0_9, %c0_10] : memref<2x128x64xbf16, #tpu.memory_space<vmem>>, vector<1x128x64xbf16>
    %13 = vector.shape_cast %12 : vector<1x128x64xbf16> to vector<128x64xbf16>
    %cst_11 = arith.constant dense<0.000000e+00> : vector<64x1024xf32>
    %14 = tpu.matmul %13, %0, %cst_11 {dimension_numbers = #tpu.dot_dimension_numbers<[0], [0], [1], [1], [0, 1, 1, 1], [], []>} : vector<128x64xbf16>, vector<128x1024xbf16>, vector<64x1024xf32> -> vector<64x1024xf32>
    %15 = vector.broadcast %1 : vector<1x1024xf32> to vector<64x1024xf32>
    %16 = arith.mulf %14, %15 : vector<64x1024xf32>
    %17 = vector.broadcast %2 : vector<1x1024xf32> to vector<64x1024xf32>
    %18 = arith.addf %16, %17 : vector<64x1024xf32>
    %cst_12 = arith.constant dense<0xFF800000> : vector<1024xf32>
    %19 = vector.multi_reduction <maximumf>, %18, %cst_12 [0] : vector<64x1024xf32> to vector<1024xf32>
    %20 = vector.shape_cast %19 : vector<1024xf32> to vector<1x1024xf32>
    %21 = tpu.concatenate %11, %20 in 0 : vector<1x1024xf32>, vector<1x1024xf32> -> vector<2x1024xf32>
    %22 = vector.shape_cast %21 : vector<2x1024xf32> to vector<1x2x1024xf32>
    %23 = arith.index_cast %arg1 : i32 to index
    %c0_13 = arith.constant 0 : index
    %c0_14 = arith.constant 0 : index
    %24 = vector.load %arg6[%23, %c0_13, %c0_14] : memref<8x2x1024xf32, #tpu.memory_space<vmem>>, vector<1x2x1024xf32>
    tpu.vector_store %arg6[%23, %c0_13, %c0_14], %22 {strides = array<i32>} : memref<8x2x1024xf32, #tpu.memory_space<vmem>>, vector<1x2x1024xf32>,
    %c7_i32 = arith.constant 7 : i32
    %25 = arith.cmpi eq, %arg1, %c7_i32 : i32
    %26 = arith.extui %25 : i1 to i32
    %c0_i32 = arith.constant 0 : i32
    %27 = arith.cmpi ne, %26, %c0_i32 : i32
    scf.if %27 {
      %c0_15 = arith.constant 0 : index
      %c0_16 = arith.constant 0 : index
      %c0_17 = arith.constant 0 : index
      %28 = vector.load %arg6[%c0_15, %c0_16, %c0_17] : memref<8x2x1024xf32, #tpu.memory_space<vmem>>, vector<8x2x1024xf32>
      %29 = arith.mulf %28, %28 : vector<8x2x1024xf32>
      %cst_18 = arith.constant dense<0.000000e+00> : vector<2x1024xf32>
      %30 = vector.multi_reduction <add>, %29, %cst_18 [0] : vector<8x2x1024xf32> to vector<2x1024xf32>
      %31 = vector.shape_cast %30 : vector<2x1024xf32> to vector<1x2x1024xf32>
      %32 = math.sqrt %31 : vector<1x2x1024xf32>
      %33 = vector.broadcast %32 : vector<1x2x1024xf32> to vector<8x2x1024xf32>
      %34 = arith.mulf %28, %33 : vector<8x2x1024xf32>
      %cst_19 = arith.constant 1.000000e+00 : f32
      %35 = vector.broadcast %cst_19 : f32 to vector<1x2x1024xf32>
      %36 = arith.addf %35, %31 : vector<1x2x1024xf32>
      %37 = tpu.reciprocal %36 {approx = true} : vector<1x2x1024xf32> -> vector<1x2x1024xf32>
      %38 = vector.broadcast %37 : vector<1x2x1024xf32> to vector<8x2x1024xf32>
      %39 = arith.mulf %34, %38 : vector<8x2x1024xf32>
      %c0_20 = arith.constant 0 : index
      %c0_21 = arith.constant 0 : index
      %c0_22 = arith.constant 0 : index
      %40 = vector.load %arg6[%c0_20, %c0_21, %c0_22] : memref<8x2x1024xf32, #tpu.memory_space<vmem>>, vector<8x2x1024xf32>
      tpu.vector_store %arg6[%c0_20, %c0_21, %c0_22], %39 {strides = array<i32>} : memref<8x2x1024xf32, #tpu.memory_space<vmem>>, vector<8x2x1024xf32>,
    } else {
    }
    return
  }
  func.func @transform_0(%arg0: i32, %arg1: i32) -> (i32, i32, i32) {
    %c0_i32 = arith.constant 0 : i32
    %c0_i32_0 = arith.constant 0 : i32
    %c0_i32_1 = arith.constant 0 : i32
    return %arg0, %c0_i32, %c0_i32_0 : i32, i32, i32
  }
  func.func @transform_1(%arg0: i32, %arg1: i32) -> (i32, i32) {
    %c0_i32 = arith.constant 0 : i32
    %c0_i32_0 = arith.constant 0 : i32
    return %c0_i32, %arg1 : i32, i32
  }
  func.func @transform_2(%arg0: i32, %arg1: i32) -> (i32, i32) {
    %c0_i32 = arith.constant 0 : i32
    %c0_i32_0 = arith.constant 0 : i32
    return %c0_i32, %arg1 : i32, i32
  }
  func.func @transform_3(%arg0: i32, %arg1: i32) -> (i32, i32) {
    %c0_i32 = arith.constant 0 : i32
    %c0_i32_0 = arith.constant 0 : i32
    return %c0_i32, %arg1 : i32, i32
  }
  func.func @transform_4(%arg0: i32, %arg1: i32) -> (i32, i32, i32) {
    %c0_i32 = arith.constant 0 : i32
    %c0_i32_0 = arith.constant 0 : i32
    %c0_i32_1 = arith.constant 0 : i32
    return %c0_i32, %arg0, %c0_i32_0 : i32, i32, i32
  }
}

</mosaic_0001>

<llo_original>
// kernel: primary_point_caps_forward.1
$region0: #{primary_point_caps_forward.1}
  #allocation0 [shape = 'u32[]', space=smem, size = 0x4, offset = 0x4, fixed_abs, tag = 'smem constant byte address 0x4 - core index']
  #allocation1 [shape = 'u32[144,128]{1,0:T(1,128)}', space=vmem, size = 0x12000, scoped, tag = 'internal scratch']
  %s0 = inlined_call_operand.vmem [shape: bf16[2,128,64], index: 0, kind: input, shape index: {}]
  %s1 = inlined_call_operand.vmem [shape: bf16[128,8192], index: 1, kind: input, shape index: {}]
  %s2 = inlined_call_operand.vmem [shape: f32[1,8192], index: 2, kind: input, shape index: {}]
  %s3 = inlined_call_operand.vmem [shape: f32[1,8192], index: 3, kind: input, shape index: {}]
  %s4 = inlined_call_operand.vmem [shape: f32[8,2,1024], index: 4, kind: output, shape index: {}]
  %s5 = sld [smem:[#allocation0]]
  $region76: #{primary_point_caps_forward.1} parent=0
    _
  %s7 = ssub.s32 1, %s5
  %s8 = scalar_select 0, %s7, %s5
  $region1: #{primary_point_caps_forward.1} parent=0
    #allocation2 [shape = 'u8[524288]{0}', space=vmem, size = 0x80000, scoped, tag = 'input window, operand 1']
    loop: start=0, step=1, limit=10
    $region2: #{primary_point_caps_forward.1} parent=1 // loop_pre_header
      _
    $region3: #{primary_point_caps_forward.1} parent=1 // loop_header
      %s10 = sphi 0, %s14
      %p11 = scmp.ge.s32.totalorder %s10, 10
      %s17 = sphi 0, %s29
      %s18 = sphi 0, %s25
      %s19 = sphi 0, %s17
      %s20 = sphi 0, %s18
      %s21 = sphi 0, %s19
      %s22 = sphi 0, %s20
      %s32 = sphi 0, %s34
      %s35 = sphi 0, %s32
      %s36 = sphi 0, %s35
      %s52 = sphi 0, %s36
      %s58 = sphi 0, %s60
      %s61 = sphi 0, %s58
      %s62 = sphi 0, %s61
      %s78 = sphi 0, %s62
      %s84 = sphi 0, %s86
      %s87 = sphi 0, %s84
      %s88 = sphi 0, %s87
      %s104 = sphi 0, %s88
      %s110 = sphi 0, %s112
      %s113 = sphi 0, %s110
      %s114 = sphi 0, %s113
      %s130 = sphi 0, %s114
      %s136 = sphi 0, %s138
      %s139 = sphi 0, %s136
      %s140 = sphi 0, %s139
      %s156 = sphi 0, %s140
    $region4: #{primary_point_caps_forward.1} parent=1 // loop_header_branch
      %13 = sbr.rel (%p11) target = $region8
    $region5: #{primary_point_caps_forward.1} parent=1 // loop_body
      %s15 = ssub.s32 %s10, 1
      %s16 = ssub.s32 %s10, 2
      %s23 = sadd.s32 1, %s18
      %p24 = scmp.ge.s32.totalorder %s23, 8
      %s25 = scalar_select %p24, 0, %s23
      %s26 = sadd.s32 1, %s17
      %s27 = scalar_select %p24, %s26, %s17
      %p28 = scmp.ge.s32.totalorder %s27, 1
      %s29 = scalar_select %p28, 0, %s27
      %s30 = ssub.s32 %s17, %s29
      %p31 = scmp.eq.s32.totalorder %s30, 0
      %s33 = sadd.s32 %s32, 1
      %s34 = scalar_select %p31, %s32, %s33
      %p37 = pneg %p31
      %p38 = scmp.eq.s32.totalorder %s10, 7
      %p39 = por %p37, %p38
      %p40 = scmp.ne.s32.totalorder %s32, %s35
      %p41 = scmp.eq.s32.totalorder %s10, 0
      %p42 = por %p40, %p41
      %p43 = scmp.ne.s32.totalorder %s32, %s35
      %p44 = scmp.eq.s32.totalorder %s15, 7
      %p45 = por %p43, %p44
      %p46 = scmp.ne.s32.totalorder %s35, %s36
      %p47 = scmp.eq.s32.totalorder %s15, 0
      %p48 = por %p46, %p47
      %p49 = scmp.ne.s32.totalorder %s35, %s36
      %p50 = scmp.eq.s32.totalorder %s16, 7
      %p51 = por %p49, %p50
      %p53 = scmp.ne.s32.totalorder %s36, %s52
      %p54 = scmp.eq.s32.totalorder %s16, 0
      %p55 = por %p53, %p54
      %s56 = ssub.s32 %s18, %s25
      %p57 = scmp.eq.s32.totalorder %s56, 0
      %s59 = sadd.s32 %s58, 1
      %s60 = scalar_select %p57, %s58, %s59
      %p63 = pneg %p57
      %p64 = scmp.eq.s32.totalorder %s10, 7
      %p65 = por %p63, %p64
      %p66 = scmp.ne.s32.totalorder %s58, %s61
      %p67 = scmp.eq.s32.totalorder %s10, 0
      %p68 = por %p66, %p67
      %p69 = scmp.ne.s32.totalorder %s58, %s61
      %p70 = scmp.eq.s32.totalorder %s15, 7
      %p71 = por %p69, %p70
      %p72 = scmp.ne.s32.totalorder %s61, %s62
      %p73 = scmp.eq.s32.totalorder %s15, 0
      %p74 = por %p72, %p73
      %p75 = scmp.ne.s32.totalorder %s61, %s62
      %p76 = scmp.eq.s32.totalorder %s16, 7
      %p77 = por %p75, %p76
      %p79 = scmp.ne.s32.totalorder %s62, %s78
      %p80 = scmp.eq.s32.totalorder %s16, 0
      %p81 = por %p79, %p80
      %s82 = ssub.s32 %s18, %s25
      %p83 = scmp.eq.s32.totalorder %s82, 0
      %s85 = sadd.s32 %s84, 1
      %s86 = scalar_select %p83, %s84, %s85
      %p89 = pneg %p83
      %p90 = scmp.eq.s32.totalorder %s10, 7
      %p91 = por %p89, %p90
      %p92 = scmp.ne.s32.totalorder %s84, %s87
      %p93 = scmp.eq.s32.totalorder %s10, 0
      %p94 = por %p92, %p93
      %p95 = scmp.ne.s32.totalorder %s84, %s87
      %p96 = scmp.eq.s32.totalorder %s15, 7
      %p97 = por %p95, %p96
      %p98 = scmp.ne.s32.totalorder %s87, %s88
      %p99 = scmp.eq.s32.totalorder %s15, 0
      %p100 = por %p98, %p99
      %p101 = scmp.ne.s32.totalorder %s87, %s88
      %p102 = scmp.eq.s32.totalorder %s16, 7
      %p103 = por %p101, %p102
      %p105 = scmp.ne.s32.totalorder %s88, %s104
      %p106 = scmp.eq.s32.totalorder %s16, 0
      %p107 = por %p105, %p106
      %s108 = ssub.s32 %s18, %s25
      %p109 = scmp.eq.s32.totalorder %s108, 0
      %s111 = sadd.s32 %s110, 1
      %s112 = scalar_select %p109, %s110, %s111
      %p115 = pneg %p109
      %p116 = scmp.eq.s32.totalorder %s10, 7
      %p117 = por %p115, %p116
      %p118 = scmp.ne.s32.totalorder %s110, %s113
      %p119 = scmp.eq.s32.totalorder %s10, 0
      %p120 = por %p118, %p119
      %p121 = scmp.ne.s32.totalorder %s110, %s113
      %p122 = scmp.eq.s32.totalorder %s15, 7
      %p123 = por %p121, %p122
      %p124 = scmp.ne.s32.totalorder %s113, %s114
      %p125 = scmp.eq.s32.totalorder %s15, 0
      %p126 = por %p124, %p125
      %p127 = scmp.ne.s32.totalorder %s113, %s114
      %p128 = scmp.eq.s32.totalorder %s16, 7
      %p129 = por %p127, %p128
      %p131 = scmp.ne.s32.totalorder %s114, %s130
      %p132 = scmp.eq.s32.totalorder %s16, 0
      %p133 = por %p131, %p132
      %s134 = ssub.s32 %s17, %s29
      %p135 = scmp.eq.s32.totalorder %s134, 0
      %s137 = sadd.s32 %s136, 1
      %s138 = scalar_select %p135, %s136, %s137
      %p141 = pneg %p135
      %p142 = scmp.eq.s32.totalorder %s10, 7
      %p143 = por %p141, %p142
      %p144 = scmp.ne.s32.totalorder %s136, %s139
      %p145 = scmp.eq.s32.totalorder %s10, 0
      %p146 = por %p144, %p145
      %p147 = scmp.ne.s32.totalorder %s136, %s139
      %p148 = scmp.eq.s32.totalorder %s15, 7
      %p149 = por %p147, %p148
      %p150 = scmp.ne.s32.totalorder %s139, %s140
      %p151 = scmp.eq.s32.totalorder %s15, 0
      %p152 = por %p150, %p151
      %p153 = scmp.ne.s32.totalorder %s139, %s140
      %p154 = scmp.eq.s32.totalorder %s16, 7
      %p155 = por %p153, %p154
      %p157 = scmp.ne.s32.totalorder %s140, %s156
      %p158 = scmp.eq.s32.totalorder %s16, 0
      %p159 = por %p157, %p158
      %p160 = scmp.le.s32.totalorder 1, %s10
      %p161 = scmp.lt.s32.totalorder %s10, 9
      %p162 = pnand %p160, %p161
      %p163 = pneg %p162
      // Predicated region
      $region9: #{primary_point_caps_forward.1} parent=5 // pred_check
        _
      $region10: #{primary_point_caps_forward.1} parent=5 // pred_check_branch
        %165 = sbr.rel (%p162) target = $region12
      $region11: #{primary_point_caps_forward.1} parent=5 // pred_region
        %s166 = ssub.s32 %s10, 1
        // Predicated region
        $region13: #{primary_point_caps_forward.1} parent=11 // pred_check
          %p167 = pneg %p48
        $region14: #{primary_point_caps_forward.1} parent=11 // pred_check_branch
          %169 = sbr.rel (%p167) target = $region16
        $region15: #{primary_point_caps_forward.1} parent=11 // pred_region
          %s170 = smul.u32 2, %s19
          %p171 = scmp.lt.s32.totalorder %s170, 1
          %s172 = scalar_select %p171, %s170, 1
          %s173 = smul.addr %s172, 16
          %s174 = smul.addr %s173, 4
          %s175 = scalar_lea.vmem %s0, %s174
          %s176 = smul.u32 2, %s19
        $region16: #{primary_point_caps_forward.1} parent=11 // pred_fallthru
          _
      $region12: #{primary_point_caps_forward.1} parent=5 // pred_fallthru
        _
      %p177 = scmp.lt.s32.totalorder %s10, 8
      // Predicated region
      $region17: #{primary_point_caps_forward.1} parent=5 // pred_check
        %p178 = pneg %p177
      $region18: #{primary_point_caps_forward.1} parent=5 // pred_check_branch
        %180 = sbr.rel (%p178) target = $region20
      $region19: #{primary_point_caps_forward.1} parent=5 // pred_region
        // Predicated region
        $region21: #{primary_point_caps_forward.1} parent=19 // pred_check
          %p181 = pneg %p68
        $region22: #{primary_point_caps_forward.1} parent=19 // pred_check_branch
          %183 = sbr.rel (%p181) target = $region24
        $region23: #{primary_point_caps_forward.1} parent=19 // pred_region
          %s184 = sand.u32 %s58, 1
          %s185 = sand.u32 %s58, 1
          %s186 = smul.addr %s185, 512
          %s187 = scalar_lea.vmem [#allocation2], %s186
          %s188 = smul.u32 8, %s18
          %s189 = smul.addr %s188, 4
          %s190 = scalar_lea.vmem %s1, %s189
          // Predicated region
          $region25: #{primary_point_caps_forward.1} parent=23 // pred_check
            _
          $region26: #{primary_point_caps_forward.1} parent=23 // pred_check_branch
            %192 = sbr.rel (0) target = $region28
          $region27: #{primary_point_caps_forward.1} parent=23 // pred_region
            // Predicated region
            $region29: #{primary_point_caps_forward.1} parent=27 // pred_check
              _
            $region30: #{primary_point_caps_forward.1} parent=27 // pred_check_branch
              %194 = sbr.rel (0) target = $region32
            $region31: #{primary_point_caps_forward.1} parent=27 // pred_region
              loop: start=0, step=1, limit=1
              $region33: #{primary_point_caps_forward.1} parent=31 // loop_pre_header
                _
              $region34: #{primary_point_caps_forward.1} parent=31 // loop_header
                %s196 = sphi 0, %s200
                %p197 = scmp.ge.s32.totalorder %s196, 1
                %s201 = sphi %s190, %s190
                %s202 = sphi %s187, %s187
              $region35: #{primary_point_caps_forward.1} parent=31 // loop_header_branch
                %199 = sbr.rel (%p197) target = $region39
              $region36: #{primary_point_caps_forward.1} parent=31 // loop_body
                %v203 = vld [vmem:[%s201] sm:$0xff]
                %204 = vst [vmem:[%s202] sm:$0xff] %v203
                %v205 = vld [vmem:[%s201 + $0x8] sm:$0xff]
                %206 = vst [vmem:[%s202 + $0x8] sm:$0xff] %v205
                %v207 = vld [vmem:[%s201 + $0x10] sm:$0xff]
                %208 = vst [vmem:[%s202 + $0x10] sm:$0xff] %v207
                %v209 = vld [vmem:[%s201 + $0x18] sm:$0xff]
                %210 = vst [vmem:[%s202 + $0x18] sm:$0xff] %v209
                %v211 = vld [vmem:[%s201 + $0x100] sm:$0xff]
                %212 = vst [vmem:[%s202 + $0x20] sm:$0xff] %v211
                %v213 = vld [vmem:[%s201 + $0x108] sm:$0xff]
                %214 = vst [vmem:[%s202 + $0x28] sm:$0xff] %v213
                %v215 = vld [vmem:[%s201 + $0x110] sm:$0xff]
                %216 = vst [vmem:[%s202 + $0x30] sm:$0xff] %v215
                %v217 = vld [vmem:[%s201 + $0x118] sm:$0xff]
                %218 = vst [vmem:[%s202 + $0x38] sm:$0xff] %v217
                %v219 = vld [vmem:[%s201 + $0x200] sm:$0xff]
                %220 = vst [vmem:[%s202 + $0x40] sm:$0xff] %v219
                %v221 = vld [vmem:[%s201 + $0x208] sm:$0xff]
                %222 = vst [vmem:[%s202 + $0x48] sm:$0xff] %v221
                %v223 = vld [vmem:[%s201 + $0x210] sm:$0xff]
                %224 = vst [vmem:[%s202 + $0x50] sm:$0xff] %v223
                %v225 = vld [vmem:[%s201 + $0x218] sm:$0xff]
                %226 = vst [vmem:[%s202 + $0x58] sm:$0xff] %v225
                %v227 = vld [vmem:[%s201 + $0x300] sm:$0xff]
                %228 = vst [vmem:[%s202 + $0x60] sm:$0xff] %v227
                %v229 = vld [vmem:[%s201 + $0x308] sm:$0xff]
                %230 = vst [vmem:[%s202 + $0x68] sm:$0xff] %v229
                %v231 = vld [vmem:[%s201 + $0x310] sm:$0xff]
                %232 = vst [vmem:[%s202 + $0x70] sm:$0xff] %v231
                %v233 = vld [vmem:[%s201 + $0x318] sm:$0xff]
                %234 = vst [vmem:[%s202 + $0x78] sm:$0xff] %v233
                %v235 = vld [vmem:[%s201 + $0x400] sm:$0xff]
                %236 = vst [vmem:[%s202 + $0x80] sm:$0xff] %v235
                %v237 = vld [vmem:[%s201 + $0x408] sm:$0xff]
                %238 = vst [vmem:[%s202 + $0x88] sm:$0xff] %v237
                %v239 = vld [vmem:[%s201 + $0x410] sm:$0xff]
                %240 = vst [vmem:[%s202 + $0x90] sm:$0xff] %v239
                %v241 = vld [vmem:[%s201 + $0x418] sm:$0xff]
                %242 = vst [vmem:[%s202 + $0x98] sm:$0xff] %v241
                %v243 = vld [vmem:[%s201 + $0x500] sm:$0xff]
                %244 = vst [vmem:[%s202 + $0xa0] sm:$0xff] %v243
                %v245 = vld [vmem:[%s201 + $0x508] sm:$0xff]
                %246 = vst [vmem:[%s202 + $0xa8] sm:$0xff] %v245
                %v247 = vld [vmem:[%s201 + $0x510] sm:$0xff]
                %248 = vst [vmem:[%s202 + $0xb0] sm:$0xff] %v247
                %v249 = vld [vmem:[%s201 + $0x518] sm:$0xff]
                %250 = vst [vmem:[%s202 + $0xb8] sm:$0xff] %v249
                %v251 = vld [vmem:[%s201 + $0x600] sm:$0xff]
                %252 = vst [vmem:[%s202 + $0xc0] sm:$0xff] %v251
                %v253 = vld [vmem:[%s201 + $0x608] sm:$0xff]
                %254 = vst [vmem:[%s202 + $0xc8] sm:$0xff] %v253
                %v255 = vld [vmem:[%s201 + $0x610] sm:$0xff]
                %256 = vst [vmem:[%s202 + $0xd0] sm:$0xff] %v255
                %v257 = vld [vmem:[%s201 + $0x618] sm:$0xff]
                %258 = vst [vmem:[%s202 + $0xd8] sm:$0xff] %v257
                %v259 = vld [vmem:[%s201 + $0x700] sm:$0xff]
                %260 = vst [vmem:[%s202 + $0xe0] sm:$0xff] %v259
                %v261 = vld [vmem:[%s201 + $0x708] sm:$0xff]
                %262 = vst [vmem:[%s202 + $0xe8] sm:$0xff] %v261
                %v263 = vld [vmem:[%s201 + $0x710] sm:$0xff]
                %264 = vst [vmem:[%s202 + $0xf0] sm:$0xff] %v263
                %v265 = vld [vmem:[%s201 + $0x718] sm:$0xff]
                %266 = vst [vmem:[%s202 + $0xf8] sm:$0xff] %v265
                %v267 = vld [vmem:[%s201 + $0x800] sm:$0xff]
                %268 = vst [vmem:[%s202 + $0x100] sm:$0xff] %v267
                %v269 = vld [vmem:[%s201 + $0x808] sm:$0xff]
                %270 = vst [vmem:[%s202 + $0x108] sm:$0xff] %v269
                %v271 = vld [vmem:[%s201 + $0x810] sm:$0xff]
                %272 = vst [vmem:[%s202 + $0x110] sm:$0xff] %v271
                %v273 = vld [vmem:[%s201 + $0x818] sm:$0xff]
                %274 = vst [vmem:[%s202 + $0x118] sm:$0xff] %v273
                %v275 = vld [vmem:[%s201 + $0x900] sm:$0xff]
                %276 = vst [vmem:[%s202 + $0x120] sm:$0xff] %v275
                %v277 = vld [vmem:[%s201 + $0x908] sm:$0xff]
                %278 = vst [vmem:[%s202 + $0x128] sm:$0xff] %v277
                %v279 = vld [vmem:[%s201 + $0x910] sm:$0xff]
                %280 = vst [vmem:[%s202 + $0x130] sm:$0xff] %v279
                %v281 = vld [vmem:[%s201 + $0x918] sm:$0xff]
                %282 = vst [vmem:[%s202 + $0x138] sm:$0xff] %v281
                %v283 = vld [vmem:[%s201 + $0xa00] sm:$0xff]
                %284 = vst [vmem:[%s202 + $0x140] sm:$0xff] %v283
                %v285 = vld [vmem:[%s201 + $0xa08] sm:$0xff]
                %286 = vst [vmem:[%s202 + $0x148] sm:$0xff] %v285
                %v287 = vld [vmem:[%s201 + $0xa10] sm:$0xff]
                %288 = vst [vmem:[%s202 + $0x150] sm:$0xff] %v287
                %v289 = vld [vmem:[%s201 + $0xa18] sm:$0xff]
                %290 = vst [vmem:[%s202 + $0x158] sm:$0xff] %v289
                %v291 = vld [vmem:[%s201 + $0xb00] sm:$0xff]
                %292 = vst [vmem:[%s202 + $0x160] sm:$0xff] %v291
                %v293 = vld [vmem:[%s201 + $0xb08] sm:$0xff]
                %294 = vst [vmem:[%s202 + $0x168] sm:$0xff] %v293
                %v295 = vld [vmem:[%s201 + $0xb10] sm:$0xff]
                %296 = vst [vmem:[%s202 + $0x170] sm:$0xff] %v295
                %v297 = vld [vmem:[%s201 + $0xb18] sm:$0xff]
                %298 = vst [vmem:[%s202 + $0x178] sm:$0xff] %v297
                %v299 = vld [vmem:[%s201 + $0xc00] sm:$0xff]
                %300 = vst [vmem:[%s202 + $0x180] sm:$0xff] %v299
                %v301 = vld [vmem:[%s201 + $0xc08] sm:$0xff]
                %302 = vst [vmem:[%s202 + $0x188] sm:$0xff] %v301
                %v303 = vld [vmem:[%s201 + $0xc10] sm:$0xff]
                %304 = vst [vmem:[%s202 + $0x190] sm:$0xff] %v303
                %v305 = vld [vmem:[%s201 + $0xc18] sm:$0xff]
                %306 = vst [vmem:[%s202 + $0x198] sm:$0xff] %v305
                %v307 = vld [vmem:[%s201 + $0xd00] sm:$0xff]
                %308 = vst [vmem:[%s202 + $0x1a0] sm:$0xff] %v307
                %v309 = vld [vmem:[%s201 + $0xd08] sm:$0xff]
                %310 = vst [vmem:[%s202 + $0x1a8] sm:$0xff] %v309
                %v311 = vld [vmem:[%s201 + $0xd10] sm:$0xff]
                %312 = vst [vmem:[%s202 + $0x1b0] sm:$0xff] %v311
                %v313 = vld [vmem:[%s201 + $0xd18] sm:$0xff]
                %314 = vst [vmem:[%s202 + $0x1b8] sm:$0xff] %v313
                %v315 = vld [vmem:[%s201 + $0xe00] sm:$0xff]
                %316 = vst [vmem:[%s202 + $0x1c0] sm:$0xff] %v315
                %v317 = vld [vmem:[%s201 + $0xe08] sm:$0xff]
                %318 = vst [vmem:[%s202 + $0x1c8] sm:$0xff] %v317
                %v319 = vld [vmem:[%s201 + $0xe10] sm:$0xff]
                %320 = vst [vmem:[%s202 + $0x1d0] sm:$0xff] %v319
                %v321 = vld [vmem:[%s201 + $0xe18] sm:$0xff]
                %322 = vst [vmem:[%s202 + $0x1d8] sm:$0xff] %v321
                %v323 = vld [vmem:[%s201 + $0xf00] sm:$0xff]
                %324 = vst [vmem:[%s202 + $0x1e0] sm:$0xff] %v323
                %v325 = vld [vmem:[%s201 + $0xf08] sm:$0xff]
                %326 = vst [vmem:[%s202 + $0x1e8] sm:$0xff] %v325
                %v327 = vld [vmem:[%s201 + $0xf10] sm:$0xff]
                %328 = vst [vmem:[%s202 + $0x1f0] sm:$0xff] %v327
                %v329 = vld [vmem:[%s201 + $0xf18] sm:$0xff]
                %330 = vst [vmem:[%s202 + $0x1f8] sm:$0xff] %v329
              $region37: #{primary_point_caps_forward.1} parent=31 // loop_footer
                %s200 = sadd.s32 1, %s196
              $region38: #{primary_point_caps_forward.1} parent=31 // loop_footer_branch
                %195 = sbr.rel target = $region34
              $region39: #{primary_point_caps_forward.1} parent=31 // loop_exit
                _
            $region32: #{primary_point_caps_forward.1} parent=27 // pred_fallthru
              _
            // Predicated region
            $region40: #{primary_point_caps_forward.1} parent=27 // pred_check
              _
            $region41: #{primary_point_caps_forward.1} parent=27 // pred_check_branch
              %332 = sbr.rel target = $region43
            $region42: #{primary_point_caps_forward.1} parent=27 // pred_region
              _
            $region43: #{primary_point_caps_forward.1} parent=27 // pred_fallthru
              _
          $region28: #{primary_point_caps_forward.1} parent=23 // pred_fallthru
            _
          %333 = vnop
        $region24: #{primary_point_caps_forward.1} parent=19 // pred_fallthru
          _
        // Predicated region
        $region44: #{primary_point_caps_forward.1} parent=19 // pred_check
          %p334 = pneg %p94
        $region45: #{primary_point_caps_forward.1} parent=19 // pred_check_branch
          %336 = sbr.rel (%p334) target = $region47
        $region46: #{primary_point_caps_forward.1} parent=19 // pred_region
          %s337 = smul.u32 8, %s18
          %p338 = scmp.lt.s32.totalorder %s337, 63
          %s339 = scalar_select %p338, %s337, 63
          %s340 = scalar_lea.vmem %s2, %s339
          %s341 = smul.u32 8, %s18
        $region47: #{primary_point_caps_forward.1} parent=19 // pred_fallthru
          _
        // Predicated region
        $region48: #{primary_point_caps_forward.1} parent=19 // pred_check
          %p342 = pneg %p120
        $region49: #{primary_point_caps_forward.1} parent=19 // pred_check_branch
          %344 = sbr.rel (%p342) target = $region51
        $region50: #{primary_point_caps_forward.1} parent=19 // pred_region
          %s345 = smul.u32 8, %s18
          %p346 = scmp.lt.s32.totalorder %s345, 63
          %s347 = scalar_select %p346, %s345, 63
          %s348 = scalar_lea.vmem %s3, %s347
          %s349 = smul.u32 8, %s18
        $region51: #{primary_point_caps_forward.1} parent=19 // pred_fallthru
          _
      $region20: #{primary_point_caps_forward.1} parent=5 // pred_fallthru
        _
      %p350 = scmp.le.s32.totalorder 1, %s10
      %p351 = scmp.lt.s32.totalorder %s10, 9
      %p352 = pnand %p350, %p351
      %p353 = pneg %p352
      // Predicated region
      $region52: #{primary_point_caps_forward.1} parent=5 // pred_check
        _
      $region53: #{primary_point_caps_forward.1} parent=5 // pred_check_branch
        %355 = sbr.rel (%p352) target = $region55
      $region54: #{primary_point_caps_forward.1} parent=5 // pred_region
        %s356 = ssub.s32 %s10, 1
        %s357 = sand.u32 %s61, 1
        %s358 = sand.u32 %s61, 1
        %s359 = smul.addr %s358, 512
        %s360 = scalar_lea.vmem [#allocation2], %s359
        // Predicated region
        $region56: #{primary_point_caps_forward.1} parent=54 // pred_check
          %p361 = pneg %p74
        $region57: #{primary_point_caps_forward.1} parent=54 // pred_check_branch
          %363 = sbr.rel (%p361) target = $region59
        $region58: #{primary_point_caps_forward.1} parent=54 // pred_region
          _
        $region59: #{primary_point_caps_forward.1} parent=54 // pred_fallthru
          _
        %s364 = smul.u32 2, %s19
        %p365 = scmp.lt.s32.totalorder %s364, 1
        %s366 = scalar_select %p365, %s364, 1
        %s367 = smul.addr %s366, 16
        %s368 = smul.addr %s367, 4
        %s369 = scalar_lea.vmem %s0, %s368
        %p370 = pneg %p48
        %p371 = pneg %p45
        %s372 = sand.u32 %s61, 1
        %s373 = sand.u32 %s61, 1
        %s374 = smul.addr %s373, 512
        %s375 = scalar_lea.vmem [#allocation2], %s374
        %p376 = pneg %p74
        %p377 = pneg %p71
        %s378 = smul.u32 8, %s20
        %p379 = scmp.lt.s32.totalorder %s378, 63
        %s380 = scalar_select %p379, %s378, 63
        %s381 = scalar_lea.vmem %s2, %s380
        %p382 = pneg %p100
        %p383 = pneg %p97
        %s384 = smul.u32 8, %s20
        %p385 = scmp.lt.s32.totalorder %s384, 63
        %s386 = scalar_select %p385, %s384, 63
        %s387 = scalar_lea.vmem %s3, %s386
        %p388 = pneg %p126
        %p389 = pneg %p123
        %p390 = pneg %p152
        %p391 = pneg %p149
        %p392 = scmp.lt.s32.totalorder %s19, 0
        %s393 = scalar_select %p392, %s19, 0
        %s394 = smul.addr %s393, 8
        %s395 = smul.addr %s394, 2
        %s396 = scalar_lea.vmem %s4, %s395
        %s397 = smul.u32 2, %s19
        %p398 = scmp.lt.s32.totalorder %s397, 1
        %s399 = scalar_select %p398, %s397, 1
        %s400 = smul.addr %s399, 16
        %s401 = smul.addr %s400, 4
        %s402 = scalar_lea.vmem %s0, %s401
        %s403 = smul.u32 2, %s19
        %s404 = smul.u32 8, %s20
        %s405 = smul.u32 8, %s20
        %p406 = scmp.lt.s32.totalorder %s405, 63
        %s407 = scalar_select %p406, %s405, 63
        %s408 = scalar_lea.vmem %s2, %s407
        %s409 = smul.u32 8, %s20
        %s410 = smul.u32 8, %s20
        %p411 = scmp.lt.s32.totalorder %s410, 63
        %s412 = scalar_select %p411, %s410, 63
        %s413 = scalar_lea.vmem %s3, %s412
        %s414 = smul.u32 8, %s20
        %p415 = scmp.lt.s32.totalorder %s19, 0
        %s416 = scalar_select %p415, %s19, 0
        %s417 = smul.addr %s416, 8
        %s418 = smul.addr %s417, 2
        %s419 = scalar_lea.vmem %s4, %s418
        %v421 = vld [vmem:[%s360] sm:$0xff]
        %v422 = vld [vmem:[%s360 + $0x8] sm:$0xff]
        %v423 = vld [vmem:[%s360 + $0x10] sm:$0xff]
        %v424 = vld [vmem:[%s360 + $0x18] sm:$0xff]
        %v425 = vld [vmem:[%s360 + $0x20] sm:$0xff]
        %v426 = vld [vmem:[%s360 + $0x28] sm:$0xff]
        %v427 = vld [vmem:[%s360 + $0x30] sm:$0xff]
        %v428 = vld [vmem:[%s360 + $0x38] sm:$0xff]
        %v429 = vld [vmem:[%s360 + $0x40] sm:$0xff]
        %v430 = vld [vmem:[%s360 + $0x48] sm:$0xff]
        %v431 = vld [vmem:[%s360 + $0x50] sm:$0xff]
        %v432 = vld [vmem:[%s360 + $0x58] sm:$0xff]
        %v433 = vld [vmem:[%s360 + $0x60] sm:$0xff]
        %v434 = vld [vmem:[%s360 + $0x68] sm:$0xff]
        %v435 = vld [vmem:[%s360 + $0x70] sm:$0xff]
        %v436 = vld [vmem:[%s360 + $0x78] sm:$0xff]
        %v437 = vld [vmem:[%s360 + $0x80] sm:$0xff]
        %v438 = vld [vmem:[%s360 + $0x88] sm:$0xff]
        %v439 = vld [vmem:[%s360 + $0x90] sm:$0xff]
        %v440 = vld [vmem:[%s360 + $0x98] sm:$0xff]
        %v441 = vld [vmem:[%s360 + $0xa0] sm:$0xff]
        %v442 = vld [vmem:[%s360 + $0xa8] sm:$0xff]
        %v443 = vld [vmem:[%s360 + $0xb0] sm:$0xff]
        %v444 = vld [vmem:[%s360 + $0xb8] sm:$0xff]
        %v445 = vld [vmem:[%s360 + $0xc0] sm:$0xff]
        %v446 = vld [vmem:[%s360 + $0xc8] sm:$0xff]
        %v447 = vld [vmem:[%s360 + $0xd0] sm:$0xff]
        %v448 = vld [vmem:[%s360 + $0xd8] sm:$0xff]
        %v449 = vld [vmem:[%s360 + $0xe0] sm:$0xff]
        %v450 = vld [vmem:[%s360 + $0xe8] sm:$0xff]
        %v451 = vld [vmem:[%s360 + $0xf0] sm:$0xff]
        %v452 = vld [vmem:[%s360 + $0xf8] sm:$0xff]
        %v453 = vld [vmem:[%s360 + $0x100] sm:$0xff]
        %v454 = vld [vmem:[%s360 + $0x108] sm:$0xff]
        %v455 = vld [vmem:[%s360 + $0x110] sm:$0xff]
        %v456 = vld [vmem:[%s360 + $0x118] sm:$0xff]
        %v457 = vld [vmem:[%s360 + $0x120] sm:$0xff]
        %v458 = vld [vmem:[%s360 + $0x128] sm:$0xff]
        %v459 = vld [vmem:[%s360 + $0x130] sm:$0xff]
        %v460 = vld [vmem:[%s360 + $0x138] sm:$0xff]
        %v461 = vld [vmem:[%s360 + $0x140] sm:$0xff]
        %v462 = vld [vmem:[%s360 + $0x148] sm:$0xff]
        %v463 = vld [vmem:[%s360 + $0x150] sm:$0xff]
        %v464 = vld [vmem:[%s360 + $0x158] sm:$0xff]
        %v465 = vld [vmem:[%s360 + $0x160] sm:$0xff]
        %v466 = vld [vmem:[%s360 + $0x168] sm:$0xff]
        %v467 = vld [vmem:[%s360 + $0x170] sm:$0xff]
        %v468 = vld [vmem:[%s360 + $0x178] sm:$0xff]
        %v469 = vld [vmem:[%s360 + $0x180] sm:$0xff]
        %v470 = vld [vmem:[%s360 + $0x188] sm:$0xff]
        %v471 = vld [vmem:[%s360 + $0x190] sm:$0xff]
        %v472 = vld [vmem:[%s360 + $0x198] sm:$0xff]
        %v473 = vld [vmem:[%s360 + $0x1a0] sm:$0xff]
        %v474 = vld [vmem:[%s360 + $0x1a8] sm:$0xff]
        %v475 = vld [vmem:[%s360 + $0x1b0] sm:$0xff]
        %v476 = vld [vmem:[%s360 + $0x1b8] sm:$0xff]
        %v477 = vld [vmem:[%s360 + $0x1c0] sm:$0xff]
        %v478 = vld [vmem:[%s360 + $0x1c8] sm:$0xff]
        %v479 = vld [vmem:[%s360 + $0x1d0] sm:$0xff]
        %v480 = vld [vmem:[%s360 + $0x1d8] sm:$0xff]
        %v481 = vld [vmem:[%s360 + $0x1e0] sm:$0xff]
        %v482 = vld [vmem:[%s360 + $0x1e8] sm:$0xff]
        %v483 = vld [vmem:[%s360 + $0x1f0] sm:$0xff]
        %v484 = vld [vmem:[%s360 + $0x1f8] sm:$0xff]
        %v485 = vld [vmem:[%s408] sm:$0xff]
        %v486 = vld [vmem:[%s413] sm:$0xff]
        %v487 = vld [vmem:[%s402] sm:$0xf]
        %v488 = vld [vmem:[%s402 + $0x4] sm:$0xf]
        %v489 = vld [vmem:[%s402 + $0x8] sm:$0xf]
        %v490 = vld [vmem:[%s402 + $0xc] sm:$0xf]
        %v491 = vld [vmem:[%s402 + $0x10] sm:$0xf]
        %v492 = vld [vmem:[%s402 + $0x14] sm:$0xf]
        %v493 = vld [vmem:[%s402 + $0x18] sm:$0xf]
        %v494 = vld [vmem:[%s402 + $0x1c] sm:$0xf]
        %v495 = vld [vmem:[%s402 + $0x20] sm:$0xf]
        %v496 = vld [vmem:[%s402 + $0x24] sm:$0xf]
        %v497 = vld [vmem:[%s402 + $0x28] sm:$0xf]
        %v498 = vld [vmem:[%s402 + $0x2c] sm:$0xf]
        %v499 = vld [vmem:[%s402 + $0x30] sm:$0xf]
        %v500 = vld [vmem:[%s402 + $0x34] sm:$0xf]
        %v501 = vld [vmem:[%s402 + $0x38] sm:$0xf]
        %v502 = vld [vmem:[%s402 + $0x3c] sm:$0xf]
        %v519 = vunpack.c.l.b16 %v487
        %v520 = vunpack.c.l.b16 %v488
        %v521 = vunpack.c.l.b16 %v489
        %v522 = vunpack.c.l.b16 %v490
        %v523 = vunpack.c.l.b16 %v491
        %v524 = vunpack.c.l.b16 %v492
        %v525 = vunpack.c.l.b16 %v493
        %v526 = vunpack.c.l.b16 %v494
        %v527 = vunpack.c.l.b16 %v495
        %v528 = vunpack.c.l.b16 %v496
        %v529 = vunpack.c.l.b16 %v497
        %v530 = vunpack.c.l.b16 %v498
        %v531 = vunpack.c.l.b16 %v499
        %v532 = vunpack.c.l.b16 %v500
        %v533 = vunpack.c.l.b16 %v501
        %v534 = vunpack.c.l.b16 %v502
        %v535 = vpack.c.b16 %v520, %v519
        %v536 = vpack.c.b16 %v522, %v521
        %v537 = vpack.c.b16 %v524, %v523
        %v538 = vpack.c.b16 %v526, %v525
        %v539 = vpack.c.b16 %v528, %v527
        %v540 = vpack.c.b16 %v530, %v529
        %v541 = vpack.c.b16 %v532, %v531
        %v542 = vpack.c.b16 %v534, %v533
        %551 = vxpose.xlu0.c.b16.start [1/8] %v535, 128
        %552 = vxpose.xlu0.c.b16.cont [2/8] %v536, 128
        %553 = vxpose.xlu0.c.b16.cont [3/8] %v537, 128
        %554 = vxpose.xlu0.c.b16.cont [4/8] %v538, 128
        %555 = vxpose.xlu0.c.b16.cont [5/8] %v539, 128
        %556 = vxpose.xlu0.c.b16.cont [6/8] %v540, 128
        %557 = vxpose.xlu0.c.b16.cont [7/8] %v541, 128
        %558 = vxpose.xlu0.c.b16.end [8/8] %v542, 128
        %v559 = vpop.trf.xlu0
        %v560 = vpop.trf.xlu0
        %v561 = vpop.trf.xlu0
        %v562 = vpop.trf.xlu0
        %v563 = vpop.trf.xlu0
        %v564 = vpop.trf.xlu0
        %v565 = vpop.trf.xlu0
        %v566 = vpop.trf.xlu0
        %v631 = vunpack.c.l.b16 %v421
        %v632 = vunpack.c.h.b16 %v421
        %v633 = vunpack.c.l.b16 %v422
        %v634 = vunpack.c.h.b16 %v422
        %v635 = vunpack.c.l.b16 %v423
        %v636 = vunpack.c.h.b16 %v423
        %v637 = vunpack.c.l.b16 %v424
        %v638 = vunpack.c.h.b16 %v424
        %v639 = vunpack.c.l.b16 %v425
        %v640 = vunpack.c.h.b16 %v425
        %v641 = vunpack.c.l.b16 %v426
        %v642 = vunpack.c.h.b16 %v426
        %v643 = vunpack.c.l.b16 %v427
        %v644 = vunpack.c.h.b16 %v427
        %v645 = vunpack.c.l.b16 %v428
        %v646 = vunpack.c.h.b16 %v428
        %v647 = vunpack.c.l.b16 %v429
        %v648 = vunpack.c.h.b16 %v429
        %v649 = vunpack.c.l.b16 %v430
        %v650 = vunpack.c.h.b16 %v430
        %v651 = vunpack.c.l.b16 %v431
        %v652 = vunpack.c.h.b16 %v431
        %v653 = vunpack.c.l.b16 %v432
        %v654 = vunpack.c.h.b16 %v432
        %v655 = vunpack.c.l.b16 %v433
        %v656 = vunpack.c.h.b16 %v433
        %v657 = vunpack.c.l.b16 %v434
        %v658 = vunpack.c.h.b16 %v434
        %v659 = vunpack.c.l.b16 %v435
        %v660 = vunpack.c.h.b16 %v435
        %v661 = vunpack.c.l.b16 %v436
        %v662 = vunpack.c.h.b16 %v436
        %v663 = vunpack.c.l.b16 %v437
        %v664 = vunpack.c.h.b16 %v437
        %v665 = vunpack.c.l.b16 %v438
        %v666 = vunpack.c.h.b16 %v438
        %v667 = vunpack.c.l.b16 %v439
        %v668 = vunpack.c.h.b16 %v439
        %v669 = vunpack.c.l.b16 %v440
        %v670 = vunpack.c.h.b16 %v440
        %v671 = vunpack.c.l.b16 %v441
        %v672 = vunpack.c.h.b16 %v441
        %v673 = vunpack.c.l.b16 %v442
        %v674 = vunpack.c.h.b16 %v442
        %v675 = vunpack.c.l.b16 %v443
        %v676 = vunpack.c.h.b16 %v443
        %v677 = vunpack.c.l.b16 %v444
        %v678 = vunpack.c.h.b16 %v444
        %v679 = vunpack.c.l.b16 %v445
        %v680 = vunpack.c.h.b16 %v445
        %v681 = vunpack.c.l.b16 %v446
        %v682 = vunpack.c.h.b16 %v446
        %v683 = vunpack.c.l.b16 %v447
        %v684 = vunpack.c.h.b16 %v447
        %v685 = vunpack.c.l.b16 %v448
        %v686 = vunpack.c.h.b16 %v448
        %v687 = vunpack.c.l.b16 %v449
        %v688 = vunpack.c.h.b16 %v449
        %v689 = vunpack.c.l.b16 %v450
        %v690 = vunpack.c.h.b16 %v450
        %v691 = vunpack.c.l.b16 %v451
        %v692 = vunpack.c.h.b16 %v451
        %v693 = vunpack.c.l.b16 %v452
        %v694 = vunpack.c.h.b16 %v452
        %v695 = vunpack.c.l.b16 %v453
        %v696 = vunpack.c.h.b16 %v453
        %v697 = vunpack.c.l.b16 %v454
        %v698 = vunpack.c.h.b16 %v454
        %v699 = vunpack.c.l.b16 %v455
        %v700 = vunpack.c.h.b16 %v455
        %v701 = vunpack.c.l.b16 %v456
        %v702 = vunpack.c.h.b16 %v456
        %v703 = vunpack.c.l.b16 %v457
        %v704 = vunpack.c.h.b16 %v457
        %v705 = vunpack.c.l.b16 %v458
        %v706 = vunpack.c.h.b16 %v458
        %v707 = vunpack.c.l.b16 %v459
        %v708 = vunpack.c.h.b16 %v459
        %v709 = vunpack.c.l.b16 %v460
        %v710 = vunpack.c.h.b16 %v460
        %v711 = vunpack.c.l.b16 %v461
        %v712 = vunpack.c.h.b16 %v461
        %v713 = vunpack.c.l.b16 %v462
        %v714 = vunpack.c.h.b16 %v462
        %v715 = vunpack.c.l.b16 %v463
        %v716 = vunpack.c.h.b16 %v463
        %v717 = vunpack.c.l.b16 %v464
        %v718 = vunpack.c.h.b16 %v464
        %v719 = vunpack.c.l.b16 %v465
        %v720 = vunpack.c.h.b16 %v465
        %v721 = vunpack.c.l.b16 %v466
        %v722 = vunpack.c.h.b16 %v466
        %v723 = vunpack.c.l.b16 %v467
        %v724 = vunpack.c.h.b16 %v467
        %v725 = vunpack.c.l.b16 %v468
        %v726 = vunpack.c.h.b16 %v468
        %v727 = vunpack.c.l.b16 %v469
        %v728 = vunpack.c.h.b16 %v469
        %v729 = vunpack.c.l.b16 %v470
        %v730 = vunpack.c.h.b16 %v470
        %v731 = vunpack.c.l.b16 %v471
        %v732 = vunpack.c.h.b16 %v471
        %v733 = vunpack.c.l.b16 %v472
        %v734 = vunpack.c.h.b16 %v472
        %v735 = vunpack.c.l.b16 %v473
        %v736 = vunpack.c.h.b16 %v473
        %v737 = vunpack.c.l.b16 %v474
        %v738 = vunpack.c.h.b16 %v474
        %v739 = vunpack.c.l.b16 %v475
        %v740 = vunpack.c.h.b16 %v475
        %v741 = vunpack.c.l.b16 %v476
        %v742 = vunpack.c.h.b16 %v476
        %v743 = vunpack.c.l.b16 %v477
        %v744 = vunpack.c.h.b16 %v477
        %v745 = vunpack.c.l.b16 %v478
        %v746 = vunpack.c.h.b16 %v478
        %v747 = vunpack.c.l.b16 %v479
        %v748 = vunpack.c.h.b16 %v479
        %v749 = vunpack.c.l.b16 %v480
        %v750 = vunpack.c.h.b16 %v480
        %v751 = vunpack.c.l.b16 %v481
        %v752 = vunpack.c.h.b16 %v481
        %v753 = vunpack.c.l.b16 %v482
        %v754 = vunpack.c.h.b16 %v482
        %v755 = vunpack.c.l.b16 %v483
        %v756 = vunpack.c.h.b16 %v483
        %v757 = vunpack.c.l.b16 %v484
        %v758 = vunpack.c.h.b16 %v484
        %v759 = vpack.c.b16 %v639, %v631
        %v760 = vpack.c.b16 %v640, %v632
        %v761 = vpack.c.b16 %v641, %v633
        %v762 = vpack.c.b16 %v642, %v634
        %v763 = vpack.c.b16 %v643, %v635
        %v764 = vpack.c.b16 %v644, %v636
        %v765 = vpack.c.b16 %v645, %v637
        %v766 = vpack.c.b16 %v646, %v638
        %v767 = vpack.c.b16 %v655, %v647
        %v768 = vpack.c.b16 %v656, %v648
        %v769 = vpack.c.b16 %v657, %v649
        %v770 = vpack.c.b16 %v658, %v650
        %v771 = vpack.c.b16 %v659, %v651
        %v772 = vpack.c.b16 %v660, %v652
        %v773 = vpack.c.b16 %v661, %v653
        %v774 = vpack.c.b16 %v662, %v654
        %v775 = vpack.c.b16 %v671, %v663
        %v776 = vpack.c.b16 %v672, %v664
        %v777 = vpack.c.b16 %v673, %v665
        %v778 = vpack.c.b16 %v674, %v666
        %v779 = vpack.c.b16 %v675, %v667
        %v780 = vpack.c.b16 %v676, %v668
        %v781 = vpack.c.b16 %v677, %v669
        %v782 = vpack.c.b16 %v678, %v670
        %v783 = vpack.c.b16 %v687, %v679
        %v784 = vpack.c.b16 %v688, %v680
        %v785 = vpack.c.b16 %v689, %v681
        %v786 = vpack.c.b16 %v690, %v682
        %v787 = vpack.c.b16 %v691, %v683
        %v788 = vpack.c.b16 %v692, %v684
        %v789 = vpack.c.b16 %v693, %v685
        %v790 = vpack.c.b16 %v694, %v686
        %v791 = vpack.c.b16 %v703, %v695
        %v792 = vpack.c.b16 %v704, %v696
        %v793 = vpack.c.b16 %v705, %v697
        %v794 = vpack.c.b16 %v706, %v698
        %v795 = vpack.c.b16 %v707, %v699
        %v796 = vpack.c.b16 %v708, %v700
        %v797 = vpack.c.b16 %v709, %v701
        %v798 = vpack.c.b16 %v710, %v702
        %v799 = vpack.c.b16 %v719, %v711
        %v800 = vpack.c.b16 %v720, %v712
        %v801 = vpack.c.b16 %v721, %v713
        %v802 = vpack.c.b16 %v722, %v714
        %v803 = vpack.c.b16 %v723, %v715
        %v804 = vpack.c.b16 %v724, %v716
        %v805 = vpack.c.b16 %v725, %v717
        %v806 = vpack.c.b16 %v726, %v718
        %v807 = vpack.c.b16 %v735, %v727
        %v808 = vpack.c.b16 %v736, %v728
        %v809 = vpack.c.b16 %v737, %v729
        %v810 = vpack.c.b16 %v738, %v730
        %v811 = vpack.c.b16 %v739, %v731
        %v812 = vpack.c.b16 %v740, %v732
        %v813 = vpack.c.b16 %v741, %v733
        %v814 = vpack.c.b16 %v742, %v734
        %v815 = vpack.c.b16 %v751, %v743
        %v816 = vpack.c.b16 %v752, %v744
        %v817 = vpack.c.b16 %v753, %v745
        %v818 = vpack.c.b16 %v754, %v746
        %v819 = vpack.c.b16 %v755, %v747
        %v820 = vpack.c.b16 %v756, %v748
        %v821 = vpack.c.b16 %v757, %v749
        %v822 = vpack.c.b16 %v758, %v750
        %887 = vmatprep.subr.bf16.mxu0 %v816
        %888 = vmatpush1.bf16.msra.mxu0 %v815
        %889 = vmatprep.subr.bf16.mxu0 %v808
        %890 = vmatpush1.bf16.msra.mxu0 %v807
        %891 = vmatprep.subr.bf16.mxu0 %v800
        %892 = vmatpush1.bf16.msra.mxu0 %v799
        %893 = vmatprep.subr.bf16.mxu0 %v792
        %894 = vmatpush1.bf16.msra.mxu0 %v791
        %895 = vmatprep.subr.bf16.mxu0 %v784
        %896 = vmatpush1.bf16.msra.mxu0 %v783
        %897 = vmatprep.subr.bf16.mxu0 %v776
        %898 = vmatpush1.bf16.msra.mxu0 %v775
        %899 = vmatprep.subr.bf16.mxu0 %v768
        %900 = vmatpush1.bf16.msra.mxu0 %v767
        %901 = vmatprep.subr.bf16.mxu0 %v760
        %902 = vmatpush1.bf16.msra.mxu0 %v759
        %903 = vmatprep.subr.bf16.mxu0 0
        %904 = vmatpush2.bf16.msra.mxu0 0
        %905 = vmatprep.subr.bf16.mxu0 0
        %906 = vmatpush2.bf16.msra.mxu0 0
        %907 = vmatprep.subr.bf16.mxu0 0
        %908 = vmatpush2.bf16.msra.mxu0 0
        %909 = vmatprep.subr.bf16.mxu0 0
        %910 = vmatpush2.bf16.msra.mxu0 0
        %911 = vmatprep.subr.bf16.mxu0 0
        %912 = vmatpush2.bf16.msra.mxu0 0
        %913 = vmatprep.subr.bf16.mxu0 0
        %914 = vmatpush2.bf16.msra.mxu0 0
        %915 = vmatprep.subr.bf16.mxu0 0
        %916 = vmatpush2.bf16.msra.mxu0 0
        %917 = vmatprep.subr.bf16.mxu0 0
        %918 = vmatpush2.bf16.msra.mxu0 0
        %919 = vmatprep.mubr.bf16.mxu0 0
        %920 = vmatmul.mubr.bf16.gmra.mxu0 %v559
        %v921 = vpop.f32.mrf.mxu0
        %v922 = vadd.f32 0.0, %v921
        %v923 = vpop.f32.mrf.mxu0
        %v924 = vadd.f32 0.0, %v923
        %v925 = vpop.f32.mrf.mxu0
        %v926 = vadd.f32 0.0, %v925
        %v927 = vpop.f32.mrf.mxu0
        %v928 = vadd.f32 0.0, %v927
        %929 = vmatprep.mubr.bf16.mxu0 0
        %930 = vmatmul.mubr.bf16.gmra.mxu0 %v560
        %v931 = vpop.f32.mrf.mxu0
        %v932 = vadd.f32 0.0, %v931
        %v933 = vpop.f32.mrf.mxu0
        %v934 = vadd.f32 0.0, %v933
        %v935 = vpop.f32.mrf.mxu0
        %v936 = vadd.f32 0.0, %v935
        %v937 = vpop.f32.mrf.mxu0
        %v938 = vadd.f32 0.0, %v937
        %939 = vmatprep.mubr.bf16.mxu0 0
        %940 = vmatmul.mubr.bf16.gmra.mxu0 %v561
        %v941 = vpop.f32.mrf.mxu0
        %v942 = vadd.f32 0.0, %v941
        %v943 = vpop.f32.mrf.mxu0
        %v944 = vadd.f32 0.0, %v943
        %v945 = vpop.f32.mrf.mxu0
        %v946 = vadd.f32 0.0, %v945
        %v947 = vpop.f32.mrf.mxu0
        %v948 = vadd.f32 0.0, %v947
        %949 = vmatprep.mubr.bf16.mxu0 0
        %950 = vmatmul.mubr.bf16.gmra.mxu0 %v562
        %v951 = vpop.f32.mrf.mxu0
        %v952 = vadd.f32 0.0, %v951
        %v953 = vpop.f32.mrf.mxu0
        %v954 = vadd.f32 0.0, %v953
        %v955 = vpop.f32.mrf.mxu0
        %v956 = vadd.f32 0.0, %v955
        %v957 = vpop.f32.mrf.mxu0
        %v958 = vadd.f32 0.0, %v957
        %959 = vdwg.mxu0
        %960 = vmatprep.subr.bf16.mxu0 %v818
        %961 = vmatpush1.bf16.msra.mxu0 %v817
        %962 = vmatprep.subr.bf16.mxu0 %v810
        %963 = vmatpush1.bf16.msra.mxu0 %v809
        %964 = vmatprep.subr.bf16.mxu0 %v802
        %965 = vmatpush1.bf16.msra.mxu0 %v801
        %966 = vmatprep.subr.bf16.mxu0 %v794
        %967 = vmatpush1.bf16.msra.mxu0 %v793
        %968 = vmatprep.subr.bf16.mxu0 %v786
        %969 = vmatpush1.bf16.msra.mxu0 %v785
        %970 = vmatprep.subr.bf16.mxu0 %v778
        %971 = vmatpush1.bf16.msra.mxu0 %v777
        %972 = vmatprep.subr.bf16.mxu0 %v770
        %973 = vmatpush1.bf16.msra.mxu0 %v769
        %974 = vmatprep.subr.bf16.mxu0 %v762
        %975 = vmatpush1.bf16.msra.mxu0 %v761
        %976 = vmatprep.subr.bf16.mxu0 0
        %977 = vmatpush2.bf16.msra.mxu0 0
        %978 = vmatprep.subr.bf16.mxu0 0
        %979 = vmatpush2.bf16.msra.mxu0 0
        %980 = vmatprep.subr.bf16.mxu0 0
        %981 = vmatpush2.bf16.msra.mxu0 0
        %982 = vmatprep.subr.bf16.mxu0 0
        %983 = vmatpush2.bf16.msra.mxu0 0
        %984 = vmatprep.subr.bf16.mxu0 0
        %985 = vmatpush2.bf16.msra.mxu0 0
        %986 = vmatprep.subr.bf16.mxu0 0
        %987 = vmatpush2.bf16.msra.mxu0 0
        %988 = vmatprep.subr.bf16.mxu0 0
        %989 = vmatpush2.bf16.msra.mxu0 0
        %990 = vmatprep.subr.bf16.mxu0 0
        %991 = vmatpush2.bf16.msra.mxu0 0
        %992 = vmatprep.mubr.bf16.mxu0 0
        %993 = vmatmul.mubr.bf16.gmra.mxu0 %v559
        %v994 = vpop.f32.mrf.mxu0
        %v995 = vadd.f32 0.0, %v994
        %v996 = vpop.f32.mrf.mxu0
        %v997 = vadd.f32 0.0, %v996
        %v998 = vpop.f32.mrf.mxu0
        %v999 = vadd.f32 0.0, %v998
        %v1000 = vpop.f32.mrf.mxu0
        %v1001 = vadd.f32 0.0, %v1000
        %1002 = vmatprep.mubr.bf16.mxu0 0
        %1003 = vmatmul.mubr.bf16.gmra.mxu0 %v560
        %v1004 = vpop.f32.mrf.mxu0
        %v1005 = vadd.f32 0.0, %v1004
        %v1006 = vpop.f32.mrf.mxu0
        %v1007 = vadd.f32 0.0, %v1006
        %v1008 = vpop.f32.mrf.mxu0
        %v1009 = vadd.f32 0.0, %v1008
        %v1010 = vpop.f32.mrf.mxu0
        %v1011 = vadd.f32 0.0, %v1010
        %1012 = vmatprep.mubr.bf16.mxu0 0
        %1013 = vmatmul.mubr.bf16.gmra.mxu0 %v561
        %v1014 = vpop.f32.mrf.mxu0
        %v1015 = vadd.f32 0.0, %v1014
        %v1016 = vpop.f32.mrf.mxu0
        %v1017 = vadd.f32 0.0, %v1016
        %v1018 = vpop.f32.mrf.mxu0
        %v1019 = vadd.f32 0.0, %v1018
        %v1020 = vpop.f32.mrf.mxu0
        %v1021 = vadd.f32 0.0, %v1020
        %1022 = vmatprep.mubr.bf16.mxu0 0
        %1023 = vmatmul.mubr.bf16.gmra.mxu0 %v562
        %v1024 = vpop.f32.mrf.mxu0
        %v1025 = vadd.f32 0.0, %v1024
        %v1026 = vpop.f32.mrf.mxu0
        %v1027 = vadd.f32 0.0, %v1026
        %v1028 = vpop.f32.mrf.mxu0
        %v1029 = vadd.f32 0.0, %v1028
        %v1030 = vpop.f32.mrf.mxu0
        %v1031 = vadd.f32 0.0, %v1030
        %1032 = vdwg.mxu0
        %1033 = vmatprep.subr.bf16.mxu0 %v820
        %1034 = vmatpush1.bf16.msra.mxu0 %v819
        %1035 = vmatprep.subr.bf16.mxu0 %v812
        %1036 = vmatpush1.bf16.msra.mxu0 %v811
        %1037 = vmatprep.subr.bf16.mxu0 %v804
        %1038 = vmatpush1.bf16.msra.mxu0 %v803
        %1039 = vmatprep.subr.bf16.mxu0 %v796
        %1040 = vmatpush1.bf16.msra.mxu0 %v795
        %1041 = vmatprep.subr.bf16.mxu0 %v788
        %1042 = vmatpush1.bf16.msra.mxu0 %v787
        %1043 = vmatprep.subr.bf16.mxu0 %v780
        %1044 = vmatpush1.bf16.msra.mxu0 %v779
        %1045 = vmatprep.subr.bf16.mxu0 %v772
        %1046 = vmatpush1.bf16.msra.mxu0 %v771
        %1047 = vmatprep.subr.bf16.mxu0 %v764
        %1048 = vmatpush1.bf16.msra.mxu0 %v763
        %1049 = vmatprep.subr.bf16.mxu0 0
        %1050 = vmatpush2.bf16.msra.mxu0 0
        %1051 = vmatprep.subr.bf16.mxu0 0
        %1052 = vmatpush2.bf16.msra.mxu0 0
        %1053 = vmatprep.subr.bf16.mxu0 0
        %1054 = vmatpush2.bf16.msra.mxu0 0
        %1055 = vmatprep.subr.bf16.mxu0 0
        %1056 = vmatpush2.bf16.msra.mxu0 0
        %1057 = vmatprep.subr.bf16.mxu0 0
        %1058 = vmatpush2.bf16.msra.mxu0 0
        %1059 = vmatprep.subr.bf16.mxu0 0
        %1060 = vmatpush2.bf16.msra.mxu0 0
        %1061 = vmatprep.subr.bf16.mxu0 0
        %1062 = vmatpush2.bf16.msra.mxu0 0
        %1063 = vmatprep.subr.bf16.mxu0 0
        %1064 = vmatpush2.bf16.msra.mxu0 0
        %1065 = vmatprep.mubr.bf16.mxu0 0
        %1066 = vmatmul.mubr.bf16.gmra.mxu0 %v559
        %v1067 = vpop.f32.mrf.mxu0
        %v1068 = vadd.f32 0.0, %v1067
        %v1069 = vpop.f32.mrf.mxu0
        %v1070 = vadd.f32 0.0, %v1069
        %v1071 = vpop.f32.mrf.mxu0
        %v1072 = vadd.f32 0.0, %v1071
        %v1073 = vpop.f32.mrf.mxu0
        %v1074 = vadd.f32 0.0, %v1073
        %1075 = vmatprep.mubr.bf16.mxu0 0
        %1076 = vmatmul.mubr.bf16.gmra.mxu0 %v560
        %v1077 = vpop.f32.mrf.mxu0
        %v1078 = vadd.f32 0.0, %v1077
        %v1079 = vpop.f32.mrf.mxu0
        %v1080 = vadd.f32 0.0, %v1079
        %v1081 = vpop.f32.mrf.mxu0
        %v1082 = vadd.f32 0.0, %v1081
        %v1083 = vpop.f32.mrf.mxu0
        %v1084 = vadd.f32 0.0, %v1083
        %1085 = vmatprep.mubr.bf16.mxu0 0
        %1086 = vmatmul.mubr.bf16.gmra.mxu0 %v561
        %v1087 = vpop.f32.mrf.mxu0
        %v1088 = vadd.f32 0.0, %v1087
        %v1089 = vpop.f32.mrf.mxu0
        %v1090 = vadd.f32 0.0, %v1089
        %v1091 = vpop.f32.mrf.mxu0
        %v1092 = vadd.f32 0.0, %v1091
        %v1093 = vpop.f32.mrf.mxu0
        %v1094 = vadd.f32 0.0, %v1093
        %1095 = vmatprep.mubr.bf16.mxu0 0
        %1096 = vmatmul.mubr.bf16.gmra.mxu0 %v562
        %v1097 = vpop.f32.mrf.mxu0
        %v1098 = vadd.f32 0.0, %v1097
        %v1099 = vpop.f32.mrf.mxu0
        %v1100 = vadd.f32 0.0, %v1099
        %v1101 = vpop.f32.mrf.mxu0
        %v1102 = vadd.f32 0.0, %v1101
        %v1103 = vpop.f32.mrf.mxu0
        %v1104 = vadd.f32 0.0, %v1103
        %1105 = vdwg.mxu0
        %1106 = vmatprep.subr.bf16.mxu0 %v822
        %1107 = vmatpush1.bf16.msra.mxu0 %v821
        %1108 = vmatprep.subr.bf16.mxu0 %v814
        %1109 = vmatpush1.bf16.msra.mxu0 %v813
        %1110 = vmatprep.subr.bf16.mxu0 %v806
        %1111 = vmatpush1.bf16.msra.mxu0 %v805
        %1112 = vmatprep.subr.bf16.mxu0 %v798
        %1113 = vmatpush1.bf16.msra.mxu0 %v797
        %1114 = vmatprep.subr.bf16.mxu0 %v790
        %1115 = vmatpush1.bf16.msra.mxu0 %v789
        %1116 = vmatprep.subr.bf16.mxu0 %v782
        %1117 = vmatpush1.bf16.msra.mxu0 %v781
        %1118 = vmatprep.subr.bf16.mxu0 %v774
        %1119 = vmatpush1.bf16.msra.mxu0 %v773
        %1120 = vmatprep.subr.bf16.mxu0 %v766
        %1121 = vmatpush1.bf16.msra.mxu0 %v765
        %1122 = vmatprep.subr.bf16.mxu0 0
        %1123 = vmatpush2.bf16.msra.mxu0 0
        %1124 = vmatprep.subr.bf16.mxu0 0
        %1125 = vmatpush2.bf16.msra.mxu0 0
        %1126 = vmatprep.subr.bf16.mxu0 0
        %1127 = vmatpush2.bf16.msra.mxu0 0
        %1128 = vmatprep.subr.bf16.mxu0 0
        %1129 = vmatpush2.bf16.msra.mxu0 0
        %1130 = vmatprep.subr.bf16.mxu0 0
        %1131 = vmatpush2.bf16.msra.mxu0 0
        %1132 = vmatprep.subr.bf16.mxu0 0
        %1133 = vmatpush2.bf16.msra.mxu0 0
        %1134 = vmatprep.subr.bf16.mxu0 0
        %1135 = vmatpush2.bf16.msra.mxu0 0
        %1136 = vmatprep.subr.bf16.mxu0 0
        %1137 = vmatpush2.bf16.msra.mxu0 0
        %1138 = vmatprep.mubr.bf16.mxu0 0
        %1139 = vmatmul.mubr.bf16.gmra.mxu0 %v559
        %v1140 = vpop.f32.mrf.mxu0
        %v1141 = vadd.f32 0.0, %v1140
        %v1142 = vpop.f32.mrf.mxu0
        %v1143 = vadd.f32 0.0, %v1142
        %v1144 = vpop.f32.mrf.mxu0
        %v1145 = vadd.f32 0.0, %v1144
        %v1146 = vpop.f32.mrf.mxu0
        %v1147 = vadd.f32 0.0, %v1146
        %1148 = vmatprep.mubr.bf16.mxu0 0
        %1149 = vmatmul.mubr.bf16.gmra.mxu0 %v560
        %v1150 = vpop.f32.mrf.mxu0
        %v1151 = vadd.f32 0.0, %v1150
        %v1152 = vpop.f32.mrf.mxu0
        %v1153 = vadd.f32 0.0, %v1152
        %v1154 = vpop.f32.mrf.mxu0
        %v1155 = vadd.f32 0.0, %v1154
        %v1156 = vpop.f32.mrf.mxu0
        %v1157 = vadd.f32 0.0, %v1156
        %1158 = vmatprep.mubr.bf16.mxu0 0
        %1159 = vmatmul.mubr.bf16.gmra.mxu0 %v561
        %v1160 = vpop.f32.mrf.mxu0
        %v1161 = vadd.f32 0.0, %v1160
        %v1162 = vpop.f32.mrf.mxu0
        %v1163 = vadd.f32 0.0, %v1162
        %v1164 = vpop.f32.mrf.mxu0
        %v1165 = vadd.f32 0.0, %v1164
        %v1166 = vpop.f32.mrf.mxu0
        %v1167 = vadd.f32 0.0, %v1166
        %1168 = vmatprep.mubr.bf16.mxu0 0
        %1169 = vmatmul.mubr.bf16.gmra.mxu0 %v562
        %v1170 = vpop.f32.mrf.mxu0
        %v1171 = vadd.f32 0.0, %v1170
        %v1172 = vpop.f32.mrf.mxu0
        %v1173 = vadd.f32 0.0, %v1172
        %v1174 = vpop.f32.mrf.mxu0
        %v1175 = vadd.f32 0.0, %v1174
        %v1176 = vpop.f32.mrf.mxu0
        %v1177 = vadd.f32 0.0, %v1176
        %1178 = vdwg.mxu0
        %v1180 = vlaneseq
        %v1181 = vshrl.u32 %v1180, 7
        %v1182 = vsub.s32 0, %v1181
        %v1183 = vrot.slane %v485, %v1182
        %v1184 = vlaneseq
        %v1185 = vshrl.u32 %v1184, 7
        %v1186 = vsub.s32 1, %v1185
        %v1187 = vrot.slane %v485, %v1186
        %v1188 = vlaneseq
        %v1189 = vshrl.u32 %v1188, 7
        %v1190 = vsub.s32 2, %v1189
        %v1191 = vrot.slane %v485, %v1190
        %v1192 = vlaneseq
        %v1193 = vshrl.u32 %v1192, 7
        %v1194 = vsub.s32 3, %v1193
        %v1195 = vrot.slane %v485, %v1194
        %v1196 = vlaneseq
        %v1197 = vshrl.u32 %v1196, 7
        %v1198 = vsub.s32 4, %v1197
        %v1199 = vrot.slane %v485, %v1198
        %v1200 = vlaneseq
        %v1201 = vshrl.u32 %v1200, 7
        %v1202 = vsub.s32 5, %v1201
        %v1203 = vrot.slane %v485, %v1202
        %v1204 = vlaneseq
        %v1205 = vshrl.u32 %v1204, 7
        %v1206 = vsub.s32 6, %v1205
        %v1207 = vrot.slane %v485, %v1206
        %v1208 = vlaneseq
        %v1209 = vshrl.u32 %v1208, 7
        %v1210 = vsub.s32 7, %v1209
        %v1211 = vrot.slane %v485, %v1210
        %v1220 = vmul.f32 %v922, %v1183
        %v1221 = vmul.f32 %v924, %v1187
        %v1222 = vmul.f32 %v995, %v1191
        %v1223 = vmul.f32 %v997, %v1195
        %v1224 = vmul.f32 %v1068, %v1199
        %v1225 = vmul.f32 %v1070, %v1203
        %v1226 = vmul.f32 %v1141, %v1207
        %v1227 = vmul.f32 %v1143, %v1211
        %v1228 = vmul.f32 %v926, %v1183
        %v1229 = vmul.f32 %v928, %v1187
        %v1230 = vmul.f32 %v999, %v1191
        %v1231 = vmul.f32 %v1001, %v1195
        %v1232 = vmul.f32 %v1072, %v1199
        %v1233 = vmul.f32 %v1074, %v1203
        %v1234 = vmul.f32 %v1145, %v1207
        %v1235 = vmul.f32 %v1147, %v1211
        %v1236 = vmul.f32 %v932, %v1183
        %v1237 = vmul.f32 %v934, %v1187
        %v1238 = vmul.f32 %v1005, %v1191
        %v1239 = vmul.f32 %v1007, %v1195
        %v1240 = vmul.f32 %v1078, %v1199
        %v1241 = vmul.f32 %v1080, %v1203
        %v1242 = vmul.f32 %v1151, %v1207
        %v1243 = vmul.f32 %v1153, %v1211
        %v1244 = vmul.f32 %v936, %v1183
        %v1245 = vmul.f32 %v938, %v1187
        %v1246 = vmul.f32 %v1009, %v1191
        %v1247 = vmul.f32 %v1011, %v1195
        %v1248 = vmul.f32 %v1082, %v1199
        %v1249 = vmul.f32 %v1084, %v1203
        %v1250 = vmul.f32 %v1155, %v1207
        %v1251 = vmul.f32 %v1157, %v1211
        %v1252 = vmul.f32 %v942, %v1183
        %v1253 = vmul.f32 %v944, %v1187
        %v1254 = vmul.f32 %v1015, %v1191
        %v1255 = vmul.f32 %v1017, %v1195
        %v1256 = vmul.f32 %v1088, %v1199
        %v1257 = vmul.f32 %v1090, %v1203
        %v1258 = vmul.f32 %v1161, %v1207
        %v1259 = vmul.f32 %v1163, %v1211
        %v1260 = vmul.f32 %v946, %v1183
        %v1261 = vmul.f32 %v948, %v1187
        %v1262 = vmul.f32 %v1019, %v1191
        %v1263 = vmul.f32 %v1021, %v1195
        %v1264 = vmul.f32 %v1092, %v1199
        %v1265 = vmul.f32 %v1094, %v1203
        %v1266 = vmul.f32 %v1165, %v1207
        %v1267 = vmul.f32 %v1167, %v1211
        %v1268 = vmul.f32 %v952, %v1183
        %v1269 = vmul.f32 %v954, %v1187
        %v1270 = vmul.f32 %v1025, %v1191
        %v1271 = vmul.f32 %v1027, %v1195
        %v1272 = vmul.f32 %v1098, %v1199
        %v1273 = vmul.f32 %v1100, %v1203
        %v1274 = vmul.f32 %v1171, %v1207
        %v1275 = vmul.f32 %v1173, %v1211
        %v1276 = vmul.f32 %v956, %v1183
        %v1277 = vmul.f32 %v958, %v1187
        %v1278 = vmul.f32 %v1029, %v1191
        %v1279 = vmul.f32 %v1031, %v1195
        %v1280 = vmul.f32 %v1102, %v1199
        %v1281 = vmul.f32 %v1104, %v1203
        %v1282 = vmul.f32 %v1175, %v1207
        %v1283 = vmul.f32 %v1177, %v1211
        %v1285 = vlaneseq
        %v1286 = vshrl.u32 %v1285, 7
        %v1287 = vsub.s32 0, %v1286
        %v1288 = vrot.slane %v486, %v1287
        %v1289 = vlaneseq
        %v1290 = vshrl.u32 %v1289, 7
        %v1291 = vsub.s32 1, %v1290
        %v1292 = vrot.slane %v486, %v1291
        %v1293 = vlaneseq
        %v1294 = vshrl.u32 %v1293, 7
        %v1295 = vsub.s32 2, %v1294
        %v1296 = vrot.slane %v486, %v1295
        %v1297 = vlaneseq
        %v1298 = vshrl.u32 %v1297, 7
        %v1299 = vsub.s32 3, %v1298
        %v1300 = vrot.slane %v486, %v1299
        %v1301 = vlaneseq
        %v1302 = vshrl.u32 %v1301, 7
        %v1303 = vsub.s32 4, %v1302
        %v1304 = vrot.slane %v486, %v1303
        %v1305 = vlaneseq
        %v1306 = vshrl.u32 %v1305, 7
        %v1307 = vsub.s32 5, %v1306
        %v1308 = vrot.slane %v486, %v1307
        %v1309 = vlaneseq
        %v1310 = vshrl.u32 %v1309, 7
        %v1311 = vsub.s32 6, %v1310
        %v1312 = vrot.slane %v486, %v1311
        %v1313 = vlaneseq
        %v1314 = vshrl.u32 %v1313, 7
        %v1315 = vsub.s32 7, %v1314
        %v1316 = vrot.slane %v486, %v1315
        %v1325 = vadd.f32 %v1220, %v1288
        %v1326 = vadd.f32 %v1221, %v1292
        %v1327 = vadd.f32 %v1222, %v1296
        %v1328 = vadd.f32 %v1223, %v1300
        %v1329 = vadd.f32 %v1224, %v1304
        %v1330 = vadd.f32 %v1225, %v1308
        %v1331 = vadd.f32 %v1226, %v1312
        %v1332 = vadd.f32 %v1227, %v1316
        %v1333 = vadd.f32 %v1228, %v1288
        %v1334 = vadd.f32 %v1229, %v1292
        %v1335 = vadd.f32 %v1230, %v1296
        %v1336 = vadd.f32 %v1231, %v1300
        %v1337 = vadd.f32 %v1232, %v1304
        %v1338 = vadd.f32 %v1233, %v1308
        %v1339 = vadd.f32 %v1234, %v1312
        %v1340 = vadd.f32 %v1235, %v1316
        %v1341 = vadd.f32 %v1236, %v1288
        %v1342 = vadd.f32 %v1237, %v1292
        %v1343 = vadd.f32 %v1238, %v1296
        %v1344 = vadd.f32 %v1239, %v1300
        %v1345 = vadd.f32 %v1240, %v1304
        %v1346 = vadd.f32 %v1241, %v1308
        %v1347 = vadd.f32 %v1242, %v1312
        %v1348 = vadd.f32 %v1243, %v1316
        %v1349 = vadd.f32 %v1244, %v1288
        %v1350 = vadd.f32 %v1245, %v1292
        %v1351 = vadd.f32 %v1246, %v1296
        %v1352 = vadd.f32 %v1247, %v1300
        %v1353 = vadd.f32 %v1248, %v1304
        %v1354 = vadd.f32 %v1249, %v1308
        %v1355 = vadd.f32 %v1250, %v1312
        %v1356 = vadd.f32 %v1251, %v1316
        %v1357 = vadd.f32 %v1252, %v1288
        %v1358 = vadd.f32 %v1253, %v1292
        %v1359 = vadd.f32 %v1254, %v1296
        %v1360 = vadd.f32 %v1255, %v1300
        %v1361 = vadd.f32 %v1256, %v1304
        %v1362 = vadd.f32 %v1257, %v1308
        %v1363 = vadd.f32 %v1258, %v1312
        %v1364 = vadd.f32 %v1259, %v1316
        %v1365 = vadd.f32 %v1260, %v1288
        %v1366 = vadd.f32 %v1261, %v1292
        %v1367 = vadd.f32 %v1262, %v1296
        %v1368 = vadd.f32 %v1263, %v1300
        %v1369 = vadd.f32 %v1264, %v1304
        %v1370 = vadd.f32 %v1265, %v1308
        %v1371 = vadd.f32 %v1266, %v1312
        %v1372 = vadd.f32 %v1267, %v1316
        %v1373 = vadd.f32 %v1268, %v1288
        %v1374 = vadd.f32 %v1269, %v1292
        %v1375 = vadd.f32 %v1270, %v1296
        %v1376 = vadd.f32 %v1271, %v1300
        %v1377 = vadd.f32 %v1272, %v1304
        %v1378 = vadd.f32 %v1273, %v1308
        %v1379 = vadd.f32 %v1274, %v1312
        %v1380 = vadd.f32 %v1275, %v1316
        %v1381 = vadd.f32 %v1276, %v1288
        %v1382 = vadd.f32 %v1277, %v1292
        %v1383 = vadd.f32 %v1278, %v1296
        %v1384 = vadd.f32 %v1279, %v1300
        %v1385 = vadd.f32 %v1280, %v1304
        %v1386 = vadd.f32 %v1281, %v1308
        %v1387 = vadd.f32 %v1282, %v1312
        %v1388 = vadd.f32 %v1283, %v1316
        %v1389 = vmax.f32 %v1325, %v1333
        %v1390 = vmax.f32 %v1389, %v1341
        %v1391 = vmax.f32 %v1390, %v1349
        %v1392 = vmax.f32 %v1391, %v1357
        %v1393 = vmax.f32 %v1392, %v1365
        %v1394 = vmax.f32 %v1393, %v1373
        %v1395 = vmax.f32 %v1394, %v1381
        %v1396 = vrot.slane %v1395, 4
        %v1397 = vmax.f32 %v1395, %v1396
        %v1398 = vrot.slane %v1397, 2
        %v1399 = vmax.f32 %v1397, %v1398
        %v1400 = vrot.slane %v1399, 1
        %v1401 = vmax.f32 %v1399, %v1400
        %v1402 = vmax.f32 %v1326, %v1334
        %v1403 = vmax.f32 %v1402, %v1342
        %v1404 = vmax.f32 %v1403, %v1350
        %v1405 = vmax.f32 %v1404, %v1358
        %v1406 = vmax.f32 %v1405, %v1366
        %v1407 = vmax.f32 %v1406, %v1374
        %v1408 = vmax.f32 %v1407, %v1382
        %v1409 = vrot.slane %v1408, 4
        %v1410 = vmax.f32 %v1408, %v1409
        %v1411 = vrot.slane %v1410, 2
        %v1412 = vmax.f32 %v1410, %v1411
        %v1413 = vrot.slane %v1412, 1
        %v1414 = vmax.f32 %v1412, %v1413
        %v1415 = vmax.f32 %v1327, %v1335
        %v1416 = vmax.f32 %v1415, %v1343
        %v1417 = vmax.f32 %v1416, %v1351
        %v1418 = vmax.f32 %v1417, %v1359
        %v1419 = vmax.f32 %v1418, %v1367
        %v1420 = vmax.f32 %v1419, %v1375
        %v1421 = vmax.f32 %v1420, %v1383
        %v1422 = vrot.slane %v1421, 4
        %v1423 = vmax.f32 %v1421, %v1422
        %v1424 = vrot.slane %v1423, 2
        %v1425 = vmax.f32 %v1423, %v1424
        %v1426 = vrot.slane %v1425, 1
        %v1427 = vmax.f32 %v1425, %v1426
        %v1428 = vmax.f32 %v1328, %v1336
        %v1429 = vmax.f32 %v1428, %v1344
        %v1430 = vmax.f32 %v1429, %v1352
        %v1431 = vmax.f32 %v1430, %v1360
        %v1432 = vmax.f32 %v1431, %v1368
        %v1433 = vmax.f32 %v1432, %v1376
        %v1434 = vmax.f32 %v1433, %v1384
        %v1435 = vrot.slane %v1434, 4
        %v1436 = vmax.f32 %v1434, %v1435
        %v1437 = vrot.slane %v1436, 2
        %v1438 = vmax.f32 %v1436, %v1437
        %v1439 = vrot.slane %v1438, 1
        %v1440 = vmax.f32 %v1438, %v1439
        %v1441 = vmax.f32 %v1329, %v1337
        %v1442 = vmax.f32 %v1441, %v1345
        %v1443 = vmax.f32 %v1442, %v1353
        %v1444 = vmax.f32 %v1443, %v1361
        %v1445 = vmax.f32 %v1444, %v1369
        %v1446 = vmax.f32 %v1445, %v1377
        %v1447 = vmax.f32 %v1446, %v1385
        %v1448 = vrot.slane %v1447, 4
        %v1449 = vmax.f32 %v1447, %v1448
        %v1450 = vrot.slane %v1449, 2
        %v1451 = vmax.f32 %v1449, %v1450
        %v1452 = vrot.slane %v1451, 1
        %v1453 = vmax.f32 %v1451, %v1452
        %v1454 = vmax.f32 %v1330, %v1338
        %v1455 = vmax.f32 %v1454, %v1346
        %v1456 = vmax.f32 %v1455, %v1354
        %v1457 = vmax.f32 %v1456, %v1362
        %v1458 = vmax.f32 %v1457, %v1370
        %v1459 = vmax.f32 %v1458, %v1378
        %v1460 = vmax.f32 %v1459, %v1386
        %v1461 = vrot.slane %v1460, 4
        %v1462 = vmax.f32 %v1460, %v1461
        %v1463 = vrot.slane %v1462, 2
        %v1464 = vmax.f32 %v1462, %v1463
        %v1465 = vrot.slane %v1464, 1
        %v1466 = vmax.f32 %v1464, %v1465
        %v1467 = vmax.f32 %v1331, %v1339
        %v1468 = vmax.f32 %v1467, %v1347
        %v1469 = vmax.f32 %v1468, %v1355
        %v1470 = vmax.f32 %v1469, %v1363
        %v1471 = vmax.f32 %v1470, %v1371
        %v1472 = vmax.f32 %v1471, %v1379
        %v1473 = vmax.f32 %v1472, %v1387
        %v1474 = vrot.slane %v1473, 4
        %v1475 = vmax.f32 %v1473, %v1474
        %v1476 = vrot.slane %v1475, 2
        %v1477 = vmax.f32 %v1475, %v1476
        %v1478 = vrot.slane %v1477, 1
        %v1479 = vmax.f32 %v1477, %v1478
        %v1480 = vmax.f32 %v1332, %v1340
        %v1481 = vmax.f32 %v1480, %v1348
        %v1482 = vmax.f32 %v1481, %v1356
        %v1483 = vmax.f32 %v1482, %v1364
        %v1484 = vmax.f32 %v1483, %v1372
        %v1485 = vmax.f32 %v1484, %v1380
        %v1486 = vmax.f32 %v1485, %v1388
        %v1487 = vrot.slane %v1486, 4
        %v1488 = vmax.f32 %v1486, %v1487
        %v1489 = vrot.slane %v1488, 2
        %v1490 = vmax.f32 %v1488, %v1489
        %v1491 = vrot.slane %v1490, 1
        %v1492 = vmax.f32 %v1490, %v1491
        %s1493 = scalar_lea.vmem %s402, 64
        %v1494 = vld [vmem:[%s1493] sm:$0xf]
        %v1495 = vld [vmem:[%s1493 + $0x4] sm:$0xf]
        %v1496 = vld [vmem:[%s1493 + $0x8] sm:$0xf]
        %v1497 = vld [vmem:[%s1493 + $0xc] sm:$0xf]
        %v1498 = vld [vmem:[%s1493 + $0x10] sm:$0xf]
        %v1499 = vld [vmem:[%s1493 + $0x14] sm:$0xf]
        %v1500 = vld [vmem:[%s1493 + $0x18] sm:$0xf]
        %v1501 = vld [vmem:[%s1493 + $0x1c] sm:$0xf]
        %v1502 = vld [vmem:[%s1493 + $0x20] sm:$0xf]
        %v1503 = vld [vmem:[%s1493 + $0x24] sm:$0xf]
        %v1504 = vld [vmem:[%s1493 + $0x28] sm:$0xf]
        %v1505 = vld [vmem:[%s1493 + $0x2c] sm:$0xf]
        %v1506 = vld [vmem:[%s1493 + $0x30] sm:$0xf]
        %v1507 = vld [vmem:[%s1493 + $0x34] sm:$0xf]
        %v1508 = vld [vmem:[%s1493 + $0x38] sm:$0xf]
        %v1509 = vld [vmem:[%s1493 + $0x3c] sm:$0xf]
        %v1526 = vunpack.c.l.b16 %v1494
        %v1527 = vunpack.c.l.b16 %v1495
        %v1528 = vunpack.c.l.b16 %v1496
        %v1529 = vunpack.c.l.b16 %v1497
        %v1530 = vunpack.c.l.b16 %v1498
        %v1531 = vunpack.c.l.b16 %v1499
        %v1532 = vunpack.c.l.b16 %v1500
        %v1533 = vunpack.c.l.b16 %v1501
        %v1534 = vunpack.c.l.b16 %v1502
        %v1535 = vunpack.c.l.b16 %v1503
        %v1536 = vunpack.c.l.b16 %v1504
        %v1537 = vunpack.c.l.b16 %v1505
        %v1538 = vunpack.c.l.b16 %v1506
        %v1539 = vunpack.c.l.b16 %v1507
        %v1540 = vunpack.c.l.b16 %v1508
        %v1541 = vunpack.c.l.b16 %v1509
        %v1542 = vpack.c.b16 %v1527, %v1526
        %v1543 = vpack.c.b16 %v1529, %v1528
        %v1544 = vpack.c.b16 %v1531, %v1530
        %v1545 = vpack.c.b16 %v1533, %v1532
        %v1546 = vpack.c.b16 %v1535, %v1534
        %v1547 = vpack.c.b16 %v1537, %v1536
        %v1548 = vpack.c.b16 %v1539, %v1538
        %v1549 = vpack.c.b16 %v1541, %v1540
        %1558 = vxpose.xlu0.c.b16.start [1/8] %v1542, 128
        %1559 = vxpose.xlu0.c.b16.cont [2/8] %v1543, 128
        %1560 = vxpose.xlu0.c.b16.cont [3/8] %v1544, 128
        %1561 = vxpose.xlu0.c.b16.cont [4/8] %v1545, 128
        %1562 = vxpose.xlu0.c.b16.cont [5/8] %v1546, 128
        %1563 = vxpose.xlu0.c.b16.cont [6/8] %v1547, 128
        %1564 = vxpose.xlu0.c.b16.cont [7/8] %v1548, 128
        %1565 = vxpose.xlu0.c.b16.end [8/8] %v1549, 128
        %v1566 = vpop.trf.xlu0
        %v1567 = vpop.trf.xlu0
        %v1568 = vpop.trf.xlu0
        %v1569 = vpop.trf.xlu0
        %v1570 = vpop.trf.xlu0
        %v1571 = vpop.trf.xlu0
        %v1572 = vpop.trf.xlu0
        %v1573 = vpop.trf.xlu0
        %1574 = vmatprep.subr.bf16.mxu0 %v816
        %1575 = vmatpush1.bf16.msra.mxu0 %v815
        %1576 = vmatprep.subr.bf16.mxu0 %v808
        %1577 = vmatpush1.bf16.msra.mxu0 %v807
        %1578 = vmatprep.subr.bf16.mxu0 %v800
        %1579 = vmatpush1.bf16.msra.mxu0 %v799
        %1580 = vmatprep.subr.bf16.mxu0 %v792
        %1581 = vmatpush1.bf16.msra.mxu0 %v791
        %1582 = vmatprep.subr.bf16.mxu0 %v784
        %1583 = vmatpush1.bf16.msra.mxu0 %v783
        %1584 = vmatprep.subr.bf16.mxu0 %v776
        %1585 = vmatpush1.bf16.msra.mxu0 %v775
        %1586 = vmatprep.subr.bf16.mxu0 %v768
        %1587 = vmatpush1.bf16.msra.mxu0 %v767
        %1588 = vmatprep.subr.bf16.mxu0 %v760
        %1589 = vmatpush1.bf16.msra.mxu0 %v759
        %1590 = vmatprep.subr.bf16.mxu0 0
        %1591 = vmatpush2.bf16.msra.mxu0 0
        %1592 = vmatprep.subr.bf16.mxu0 0
        %1593 = vmatpush2.bf16.msra.mxu0 0
        %1594 = vmatprep.subr.bf16.mxu0 0
        %1595 = vmatpush2.bf16.msra.mxu0 0
        %1596 = vmatprep.subr.bf16.mxu0 0
        %1597 = vmatpush2.bf16.msra.mxu0 0
        %1598 = vmatprep.subr.bf16.mxu0 0
        %1599 = vmatpush2.bf16.msra.mxu0 0
        %1600 = vmatprep.subr.bf16.mxu0 0
        %1601 = vmatpush2.bf16.msra.mxu0 0
        %1602 = vmatprep.subr.bf16.mxu0 0
        %1603 = vmatpush2.bf16.msra.mxu0 0
        %1604 = vmatprep.subr.bf16.mxu0 0
        %1605 = vmatpush2.bf16.msra.mxu0 0
        %1606 = vmatprep.mubr.bf16.mxu0 0
        %1607 = vmatmul.mubr.bf16.gmra.mxu0 %v1566
        %v1608 = vpop.f32.mrf.mxu0
        %v1609 = vadd.f32 0.0, %v1608
        %v1610 = vpop.f32.mrf.mxu0
        %v1611 = vadd.f32 0.0, %v1610
        %v1612 = vpop.f32.mrf.mxu0
        %v1613 = vadd.f32 0.0, %v1612
        %v1614 = vpop.f32.mrf.mxu0
        %v1615 = vadd.f32 0.0, %v1614
        %1616 = vmatprep.mubr.bf16.mxu0 0
        %1617 = vmatmul.mubr.bf16.gmra.mxu0 %v1567
        %v1618 = vpop.f32.mrf.mxu0
        %v1619 = vadd.f32 0.0, %v1618
        %v1620 = vpop.f32.mrf.mxu0
        %v1621 = vadd.f32 0.0, %v1620
        %v1622 = vpop.f32.mrf.mxu0
        %v1623 = vadd.f32 0.0, %v1622
        %v1624 = vpop.f32.mrf.mxu0
        %v1625 = vadd.f32 0.0, %v1624
        %1626 = vmatprep.mubr.bf16.mxu0 0
        %1627 = vmatmul.mubr.bf16.gmra.mxu0 %v1568
        %v1628 = vpop.f32.mrf.mxu0
        %v1629 = vadd.f32 0.0, %v1628
        %v1630 = vpop.f32.mrf.mxu0
        %v1631 = vadd.f32 0.0, %v1630
        %v1632 = vpop.f32.mrf.mxu0
        %v1633 = vadd.f32 0.0, %v1632
        %v1634 = vpop.f32.mrf.mxu0
        %v1635 = vadd.f32 0.0, %v1634
        %1636 = vmatprep.mubr.bf16.mxu0 0
        %1637 = vmatmul.mubr.bf16.gmra.mxu0 %v1569
        %v1638 = vpop.f32.mrf.mxu0
        %v1639 = vadd.f32 0.0, %v1638
        %v1640 = vpop.f32.mrf.mxu0
        %v1641 = vadd.f32 0.0, %v1640
        %v1642 = vpop.f32.mrf.mxu0
        %v1643 = vadd.f32 0.0, %v1642
        %v1644 = vpop.f32.mrf.mxu0
        %v1645 = vadd.f32 0.0, %v1644
        %1646 = vdwg.mxu0
        %1647 = vmatprep.subr.bf16.mxu0 %v818
        %1648 = vmatpush1.bf16.msra.mxu0 %v817
        %1649 = vmatprep.subr.bf16.mxu0 %v810
        %1650 = vmatpush1.bf16.msra.mxu0 %v809
        %1651 = vmatprep.subr.bf16.mxu0 %v802
        %1652 = vmatpush1.bf16.msra.mxu0 %v801
        %1653 = vmatprep.subr.bf16.mxu0 %v794
        %1654 = vmatpush1.bf16.msra.mxu0 %v793
        %1655 = vmatprep.subr.bf16.mxu0 %v786
        %1656 = vmatpush1.bf16.msra.mxu0 %v785
        %1657 = vmatprep.subr.bf16.mxu0 %v778
        %1658 = vmatpush1.bf16.msra.mxu0 %v777
        %1659 = vmatprep.subr.bf16.mxu0 %v770
        %1660 = vmatpush1.bf16.msra.mxu0 %v769
        %1661 = vmatprep.subr.bf16.mxu0 %v762
        %1662 = vmatpush1.bf16.msra.mxu0 %v761
        %1663 = vmatprep.subr.bf16.mxu0 0
        %1664 = vmatpush2.bf16.msra.mxu0 0
        %1665 = vmatprep.subr.bf16.mxu0 0
        %1666 = vmatpush2.bf16.msra.mxu0 0
        %1667 = vmatprep.subr.bf16.mxu0 0
        %1668 = vmatpush2.bf16.msra.mxu0 0
        %1669 = vmatprep.subr.bf16.mxu0 0
        %1670 = vmatpush2.bf16.msra.mxu0 0
        %1671 = vmatprep.subr.bf16.mxu0 0
        %1672 = vmatpush2.bf16.msra.mxu0 0
        %1673 = vmatprep.subr.bf16.mxu0 0
        %1674 = vmatpush2.bf16.msra.mxu0 0
        %1675 = vmatprep.subr.bf16.mxu0 0
        %1676 = vmatpush2.bf16.msra.mxu0 0
        %1677 = vmatprep.subr.bf16.mxu0 0
        %1678 = vmatpush2.bf16.msra.mxu0 0
        %1679 = vmatprep.mubr.bf16.mxu0 0
        %1680 = vmatmul.mubr.bf16.gmra.mxu0 %v1566
        %v1681 = vpop.f32.mrf.mxu0
        %v1682 = vadd.f32 0.0, %v1681
        %v1683 = vpop.f32.mrf.mxu0
        %v1684 = vadd.f32 0.0, %v1683
        %v1685 = vpop.f32.mrf.mxu0
        %v1686 = vadd.f32 0.0, %v1685
        %v1687 = vpop.f32.mrf.mxu0
        %v1688 = vadd.f32 0.0, %v1687
        %1689 = vmatprep.mubr.bf16.mxu0 0
        %1690 = vmatmul.mubr.bf16.gmra.mxu0 %v1567
        %v1691 = vpop.f32.mrf.mxu0
        %v1692 = vadd.f32 0.0, %v1691
        %v1693 = vpop.f32.mrf.mxu0
        %v1694 = vadd.f32 0.0, %v1693
        %v1695 = vpop.f32.mrf.mxu0
        %v1696 = vadd.f32 0.0, %v1695
        %v1697 = vpop.f32.mrf.mxu0
        %v1698 = vadd.f32 0.0, %v1697
        %1699 = vmatprep.mubr.bf16.mxu0 0
        %1700 = vmatmul.mubr.bf16.gmra.mxu0 %v1568
        %v1701 = vpop.f32.mrf.mxu0
        %v1702 = vadd.f32 0.0, %v1701
        %v1703 = vpop.f32.mrf.mxu0
        %v1704 = vadd.f32 0.0, %v1703
        %v1705 = vpop.f32.mrf.mxu0
        %v1706 = vadd.f32 0.0, %v1705
        %v1707 = vpop.f32.mrf.mxu0
        %v1708 = vadd.f32 0.0, %v1707
        %1709 = vmatprep.mubr.bf16.mxu0 0
        %1710 = vmatmul.mubr.bf16.gmra.mxu0 %v1569
        %v1711 = vpop.f32.mrf.mxu0
        %v1712 = vadd.f32 0.0, %v1711
        %v1713 = vpop.f32.mrf.mxu0
        %v1714 = vadd.f32 0.0, %v1713
        %v1715 = vpop.f32.mrf.mxu0
        %v1716 = vadd.f32 0.0, %v1715
        %v1717 = vpop.f32.mrf.mxu0
        %v1718 = vadd.f32 0.0, %v1717
        %1719 = vdwg.mxu0
        %1720 = vmatprep.subr.bf16.mxu0 %v820
        %1721 = vmatpush1.bf16.msra.mxu0 %v819
        %1722 = vmatprep.subr.bf16.mxu0 %v812
        %1723 = vmatpush1.bf16.msra.mxu0 %v811
        %1724 = vmatprep.subr.bf16.mxu0 %v804
        %1725 = vmatpush1.bf16.msra.mxu0 %v803
        %1726 = vmatprep.subr.bf16.mxu0 %v796
        %1727 = vmatpush1.bf16.msra.mxu0 %v795
        %1728 = vmatprep.subr.bf16.mxu0 %v788
        %1729 = vmatpush1.bf16.msra.mxu0 %v787
        %1730 = vmatprep.subr.bf16.mxu0 %v780
        %1731 = vmatpush1.bf16.msra.mxu0 %v779
        %1732 = vmatprep.subr.bf16.mxu0 %v772
        %1733 = vmatpush1.bf16.msra.mxu0 %v771
        %1734 = vmatprep.subr.bf16.mxu0 %v764
        %1735 = vmatpush1.bf16.msra.mxu0 %v763
        %1736 = vmatprep.subr.bf16.mxu0 0
        %1737 = vmatpush2.bf16.msra.mxu0 0
        %1738 = vmatprep.subr.bf16.mxu0 0
        %1739 = vmatpush2.bf16.msra.mxu0 0
        %1740 = vmatprep.subr.bf16.mxu0 0
        %1741 = vmatpush2.bf16.msra.mxu0 0
        %1742 = vmatprep.subr.bf16.mxu0 0
        %1743 = vmatpush2.bf16.msra.mxu0 0
        %1744 = vmatprep.subr.bf16.mxu0 0
        %1745 = vmatpush2.bf16.msra.mxu0 0
        %1746 = vmatprep.subr.bf16.mxu0 0
        %1747 = vmatpush2.bf16.msra.mxu0 0
        %1748 = vmatprep.subr.bf16.mxu0 0
        %1749 = vmatpush2.bf16.msra.mxu0 0
        %1750 = vmatprep.subr.bf16.mxu0 0
        %1751 = vmatpush2.bf16.msra.mxu0 0
        %1752 = vmatprep.mubr.bf16.mxu0 0
        %1753 = vmatmul.mubr.bf16.gmra.mxu0 %v1566
        %v1754 = vpop.f32.mrf.mxu0
        %v1755 = vadd.f32 0.0, %v1754
        %v1756 = vpop.f32.mrf.mxu0
        %v1757 = vadd.f32 0.0, %v1756
        %v1758 = vpop.f32.mrf.mxu0
        %v1759 = vadd.f32 0.0, %v1758
        %v1760 = vpop.f32.mrf.mxu0
        %v1761 = vadd.f32 0.0, %v1760
        %1762 = vmatprep.mubr.bf16.mxu0 0
        %1763 = vmatmul.mubr.bf16.gmra.mxu0 %v1567
        %v1764 = vpop.f32.mrf.mxu0
        %v1765 = vadd.f32 0.0, %v1764
        %v1766 = vpop.f32.mrf.mxu0
        %v1767 = vadd.f32 0.0, %v1766
        %v1768 = vpop.f32.mrf.mxu0
        %v1769 = vadd.f32 0.0, %v1768
        %v1770 = vpop.f32.mrf.mxu0
        %v1771 = vadd.f32 0.0, %v1770
        %1772 = vmatprep.mubr.bf16.mxu0 0
        %1773 = vmatmul.mubr.bf16.gmra.mxu0 %v1568
        %v1774 = vpop.f32.mrf.mxu0
        %v1775 = vadd.f32 0.0, %v1774
        %v1776 = vpop.f32.mrf.mxu0
        %v1777 = vadd.f32 0.0, %v1776
        %v1778 = vpop.f32.mrf.mxu0
        %v1779 = vadd.f32 0.0, %v1778
        %v1780 = vpop.f32.mrf.mxu0
        %v1781 = vadd.f32 0.0, %v1780
        %1782 = vmatprep.mubr.bf16.mxu0 0
        %1783 = vmatmul.mubr.bf16.gmra.mxu0 %v1569
        %v1784 = vpop.f32.mrf.mxu0
        %v1785 = vadd.f32 0.0, %v1784
        %v1786 = vpop.f32.mrf.mxu0
        %v1787 = vadd.f32 0.0, %v1786
        %v1788 = vpop.f32.mrf.mxu0
        %v1789 = vadd.f32 0.0, %v1788
        %v1790 = vpop.f32.mrf.mxu0
        %v1791 = vadd.f32 0.0, %v1790
        %1792 = vdwg.mxu0
        %1793 = vmatprep.subr.bf16.mxu0 %v822
        %1794 = vmatpush1.bf16.msra.mxu0 %v821
        %1795 = vmatprep.subr.bf16.mxu0 %v814
        %1796 = vmatpush1.bf16.msra.mxu0 %v813
        %1797 = vmatprep.subr.bf16.mxu0 %v806
        %1798 = vmatpush1.bf16.msra.mxu0 %v805
        %1799 = vmatprep.subr.bf16.mxu0 %v798
        %1800 = vmatpush1.bf16.msra.mxu0 %v797
        %1801 = vmatprep.subr.bf16.mxu0 %v790
        %1802 = vmatpush1.bf16.msra.mxu0 %v789
        %1803 = vmatprep.subr.bf16.mxu0 %v782
        %1804 = vmatpush1.bf16.msra.mxu0 %v781
        %1805 = vmatprep.subr.bf16.mxu0 %v774
        %1806 = vmatpush1.bf16.msra.mxu0 %v773
        %1807 = vmatprep.subr.bf16.mxu0 %v766
        %1808 = vmatpush1.bf16.msra.mxu0 %v765
        %1809 = vmatprep.subr.bf16.mxu0 0
        %1810 = vmatpush2.bf16.msra.mxu0 0
        %1811 = vmatprep.subr.bf16.mxu0 0
        %1812 = vmatpush2.bf16.msra.mxu0 0
        %1813 = vmatprep.subr.bf16.mxu0 0
        %1814 = vmatpush2.bf16.msra.mxu0 0
        %1815 = vmatprep.subr.bf16.mxu0 0
        %1816 = vmatpush2.bf16.msra.mxu0 0
        %1817 = vmatprep.subr.bf16.mxu0 0
        %1818 = vmatpush2.bf16.msra.mxu0 0
        %1819 = vmatprep.subr.bf16.mxu0 0
        %1820 = vmatpush2.bf16.msra.mxu0 0
        %1821 = vmatprep.subr.bf16.mxu0 0
        %1822 = vmatpush2.bf16.msra.mxu0 0
        %1823 = vmatprep.subr.bf16.mxu0 0
        %1824 = vmatpush2.bf16.msra.mxu0 0
        %1825 = vmatprep.mubr.bf16.mxu0 0
        %1826 = vmatmul.mubr.bf16.gmra.mxu0 %v1566
        %v1827 = vpop.f32.mrf.mxu0
        %v1828 = vadd.f32 0.0, %v1827
        %v1829 = vpop.f32.mrf.mxu0
        %v1830 = vadd.f32 0.0, %v1829
        %v1831 = vpop.f32.mrf.mxu0
        %v1832 = vadd.f32 0.0, %v1831
        %v1833 = vpop.f32.mrf.mxu0
        %v1834 = vadd.f32 0.0, %v1833
        %1835 = vmatprep.mubr.bf16.mxu0 0
        %1836 = vmatmul.mubr.bf16.gmra.mxu0 %v1567
        %v1837 = vpop.f32.mrf.mxu0
        %v1838 = vadd.f32 0.0, %v1837
        %v1839 = vpop.f32.mrf.mxu0
        %v1840 = vadd.f32 0.0, %v1839
        %v1841 = vpop.f32.mrf.mxu0
        %v1842 = vadd.f32 0.0, %v1841
        %v1843 = vpop.f32.mrf.mxu0
        %v1844 = vadd.f32 0.0, %v1843
        %1845 = vmatprep.mubr.bf16.mxu0 0
        %1846 = vmatmul.mubr.bf16.gmra.mxu0 %v1568
        %v1847 = vpop.f32.mrf.mxu0
        %v1848 = vadd.f32 0.0, %v1847
        %v1849 = vpop.f32.mrf.mxu0
        %v1850 = vadd.f32 0.0, %v1849
        %v1851 = vpop.f32.mrf.mxu0
        %v1852 = vadd.f32 0.0, %v1851
        %v1853 = vpop.f32.mrf.mxu0
        %v1854 = vadd.f32 0.0, %v1853
        %1855 = vmatprep.mubr.bf16.mxu0 0
        %1856 = vmatmul.mubr.bf16.gmra.mxu0 %v1569
        %v1857 = vpop.f32.mrf.mxu0
        %v1858 = vadd.f32 0.0, %v1857
        %v1859 = vpop.f32.mrf.mxu0
        %v1860 = vadd.f32 0.0, %v1859
        %v1861 = vpop.f32.mrf.mxu0
        %v1862 = vadd.f32 0.0, %v1861
        %v1863 = vpop.f32.mrf.mxu0
        %v1864 = vadd.f32 0.0, %v1863
        %1865 = vdwg.mxu0
        %v1866 = vmul.f32 %v1609, %v1183
        %v1867 = vmul.f32 %v1611, %v1187
        %v1868 = vmul.f32 %v1682, %v1191
        %v1869 = vmul.f32 %v1684, %v1195
        %v1870 = vmul.f32 %v1755, %v1199
        %v1871 = vmul.f32 %v1757, %v1203
        %v1872 = vmul.f32 %v1828, %v1207
        %v1873 = vmul.f32 %v1830, %v1211
        %v1874 = vmul.f32 %v1613, %v1183
        %v1875 = vmul.f32 %v1615, %v1187
        %v1876 = vmul.f32 %v1686, %v1191
        %v1877 = vmul.f32 %v1688, %v1195
        %v1878 = vmul.f32 %v1759, %v1199
        %v1879 = vmul.f32 %v1761, %v1203
        %v1880 = vmul.f32 %v1832, %v1207
        %v1881 = vmul.f32 %v1834, %v1211
        %v1882 = vmul.f32 %v1619, %v1183
        %v1883 = vmul.f32 %v1621, %v1187
        %v1884 = vmul.f32 %v1692, %v1191
        %v1885 = vmul.f32 %v1694, %v1195
        %v1886 = vmul.f32 %v1765, %v1199
        %v1887 = vmul.f32 %v1767, %v1203
        %v1888 = vmul.f32 %v1838, %v1207
        %v1889 = vmul.f32 %v1840, %v1211
        %v1890 = vmul.f32 %v1623, %v1183
        %v1891 = vmul.f32 %v1625, %v1187
        %v1892 = vmul.f32 %v1696, %v1191
        %v1893 = vmul.f32 %v1698, %v1195
        %v1894 = vmul.f32 %v1769, %v1199
        %v1895 = vmul.f32 %v1771, %v1203
        %v1896 = vmul.f32 %v1842, %v1207
        %v1897 = vmul.f32 %v1844, %v1211
        %v1898 = vmul.f32 %v1629, %v1183
        %v1899 = vmul.f32 %v1631, %v1187
        %v1900 = vmul.f32 %v1702, %v1191
        %v1901 = vmul.f32 %v1704, %v1195
        %v1902 = vmul.f32 %v1775, %v1199
        %v1903 = vmul.f32 %v1777, %v1203
        %v1904 = vmul.f32 %v1848, %v1207
        %v1905 = vmul.f32 %v1850, %v1211
        %v1906 = vmul.f32 %v1633, %v1183
        %v1907 = vmul.f32 %v1635, %v1187
        %v1908 = vmul.f32 %v1706, %v1191
        %v1909 = vmul.f32 %v1708, %v1195
        %v1910 = vmul.f32 %v1779, %v1199
        %v1911 = vmul.f32 %v1781, %v1203
        %v1912 = vmul.f32 %v1852, %v1207
        %v1913 = vmul.f32 %v1854, %v1211
        %v1914 = vmul.f32 %v1639, %v1183
        %v1915 = vmul.f32 %v1641, %v1187
        %v1916 = vmul.f32 %v1712, %v1191
        %v1917 = vmul.f32 %v1714, %v1195
        %v1918 = vmul.f32 %v1785, %v1199
        %v1919 = vmul.f32 %v1787, %v1203
        %v1920 = vmul.f32 %v1858, %v1207
        %v1921 = vmul.f32 %v1860, %v1211
        %v1922 = vmul.f32 %v1643, %v1183
        %v1923 = vmul.f32 %v1645, %v1187
        %v1924 = vmul.f32 %v1716, %v1191
        %v1925 = vmul.f32 %v1718, %v1195
        %v1926 = vmul.f32 %v1789, %v1199
        %v1927 = vmul.f32 %v1791, %v1203
        %v1928 = vmul.f32 %v1862, %v1207
        %v1929 = vmul.f32 %v1864, %v1211
        %v1930 = vadd.f32 %v1866, %v1288
        %v1931 = vadd.f32 %v1867, %v1292
        %v1932 = vadd.f32 %v1868, %v1296
        %v1933 = vadd.f32 %v1869, %v1300
        %v1934 = vadd.f32 %v1870, %v1304
        %v1935 = vadd.f32 %v1871, %v1308
        %v1936 = vadd.f32 %v1872, %v1312
        %v1937 = vadd.f32 %v1873, %v1316
        %v1938 = vadd.f32 %v1874, %v1288
        %v1939 = vadd.f32 %v1875, %v1292
        %v1940 = vadd.f32 %v1876, %v1296
        %v1941 = vadd.f32 %v1877, %v1300
        %v1942 = vadd.f32 %v1878, %v1304
        %v1943 = vadd.f32 %v1879, %v1308
        %v1944 = vadd.f32 %v1880, %v1312
        %v1945 = vadd.f32 %v1881, %v1316
        %v1946 = vadd.f32 %v1882, %v1288
        %v1947 = vadd.f32 %v1883, %v1292
        %v1948 = vadd.f32 %v1884, %v1296
        %v1949 = vadd.f32 %v1885, %v1300
        %v1950 = vadd.f32 %v1886, %v1304
        %v1951 = vadd.f32 %v1887, %v1308
        %v1952 = vadd.f32 %v1888, %v1312
        %v1953 = vadd.f32 %v1889, %v1316
        %v1954 = vadd.f32 %v1890, %v1288
        %v1955 = vadd.f32 %v1891, %v1292
        %v1956 = vadd.f32 %v1892, %v1296
        %v1957 = vadd.f32 %v1893, %v1300
        %v1958 = vadd.f32 %v1894, %v1304
        %v1959 = vadd.f32 %v1895, %v1308
        %v1960 = vadd.f32 %v1896, %v1312
        %v1961 = vadd.f32 %v1897, %v1316
        %v1962 = vadd.f32 %v1898, %v1288
        %v1963 = vadd.f32 %v1899, %v1292
        %v1964 = vadd.f32 %v1900, %v1296
        %v1965 = vadd.f32 %v1901, %v1300
        %v1966 = vadd.f32 %v1902, %v1304
        %v1967 = vadd.f32 %v1903, %v1308
        %v1968 = vadd.f32 %v1904, %v1312
        %v1969 = vadd.f32 %v1905, %v1316
        %v1970 = vadd.f32 %v1906, %v1288
        %v1971 = vadd.f32 %v1907, %v1292
        %v1972 = vadd.f32 %v1908, %v1296
        %v1973 = vadd.f32 %v1909, %v1300
        %v1974 = vadd.f32 %v1910, %v1304
        %v1975 = vadd.f32 %v1911, %v1308
        %v1976 = vadd.f32 %v1912, %v1312
        %v1977 = vadd.f32 %v1913, %v1316
        %v1978 = vadd.f32 %v1914, %v1288
        %v1979 = vadd.f32 %v1915, %v1292
        %v1980 = vadd.f32 %v1916, %v1296
        %v1981 = vadd.f32 %v1917, %v1300
        %v1982 = vadd.f32 %v1918, %v1304
        %v1983 = vadd.f32 %v1919, %v1308
        %v1984 = vadd.f32 %v1920, %v1312
        %v1985 = vadd.f32 %v1921, %v1316
        %v1986 = vadd.f32 %v1922, %v1288
        %v1987 = vadd.f32 %v1923, %v1292
        %v1988 = vadd.f32 %v1924, %v1296
        %v1989 = vadd.f32 %v1925, %v1300
        %v1990 = vadd.f32 %v1926, %v1304
        %v1991 = vadd.f32 %v1927, %v1308
        %v1992 = vadd.f32 %v1928, %v1312
        %v1993 = vadd.f32 %v1929, %v1316
        %v1994 = vmax.f32 %v1930, %v1938
        %v1995 = vmax.f32 %v1994, %v1946
        %v1996 = vmax.f32 %v1995, %v1954
        %v1997 = vmax.f32 %v1996, %v1962
        %v1998 = vmax.f32 %v1997, %v1970
        %v1999 = vmax.f32 %v1998, %v1978
        %v2000 = vmax.f32 %v1999, %v1986
        %v2001 = vrot.slane %v2000, 4
        %v2002 = vmax.f32 %v2000, %v2001
        %v2003 = vrot.slane %v2002, 2
        %v2004 = vmax.f32 %v2002, %v2003
        %v2005 = vrot.slane %v2004, 1
        %v2006 = vmax.f32 %v2004, %v2005
        %v2007 = vmax.f32 %v1931, %v1939
        %v2008 = vmax.f32 %v2007, %v1947
        %v2009 = vmax.f32 %v2008, %v1955
        %v2010 = vmax.f32 %v2009, %v1963
        %v2011 = vmax.f32 %v2010, %v1971
        %v2012 = vmax.f32 %v2011, %v1979
        %v2013 = vmax.f32 %v2012, %v1987
        %v2014 = vrot.slane %v2013, 4
        %v2015 = vmax.f32 %v2013, %v2014
        %v2016 = vrot.slane %v2015, 2
        %v2017 = vmax.f32 %v2015, %v2016
        %v2018 = vrot.slane %v2017, 1
        %v2019 = vmax.f32 %v2017, %v2018
        %v2020 = vmax.f32 %v1932, %v1940
        %v2021 = vmax.f32 %v2020, %v1948
        %v2022 = vmax.f32 %v2021, %v1956
        %v2023 = vmax.f32 %v2022, %v1964
        %v2024 = vmax.f32 %v2023, %v1972
        %v2025 = vmax.f32 %v2024, %v1980
        %v2026 = vmax.f32 %v2025, %v1988
        %v2027 = vrot.slane %v2026, 4
        %v2028 = vmax.f32 %v2026, %v2027
        %v2029 = vrot.slane %v2028, 2
        %v2030 = vmax.f32 %v2028, %v2029
        %v2031 = vrot.slane %v2030, 1
        %v2032 = vmax.f32 %v2030, %v2031
        %v2033 = vmax.f32 %v1933, %v1941
        %v2034 = vmax.f32 %v2033, %v1949
        %v2035 = vmax.f32 %v2034, %v1957
        %v2036 = vmax.f32 %v2035, %v1965
        %v2037 = vmax.f32 %v2036, %v1973
        %v2038 = vmax.f32 %v2037, %v1981
        %v2039 = vmax.f32 %v2038, %v1989
        %v2040 = vrot.slane %v2039, 4
        %v2041 = vmax.f32 %v2039, %v2040
        %v2042 = vrot.slane %v2041, 2
        %v2043 = vmax.f32 %v2041, %v2042
        %v2044 = vrot.slane %v2043, 1
        %v2045 = vmax.f32 %v2043, %v2044
        %v2046 = vmax.f32 %v1934, %v1942
        %v2047 = vmax.f32 %v2046, %v1950
        %v2048 = vmax.f32 %v2047, %v1958
        %v2049 = vmax.f32 %v2048, %v1966
        %v2050 = vmax.f32 %v2049, %v1974
        %v2051 = vmax.f32 %v2050, %v1982
        %v2052 = vmax.f32 %v2051, %v1990
        %v2053 = vrot.slane %v2052, 4
        %v2054 = vmax.f32 %v2052, %v2053
        %v2055 = vrot.slane %v2054, 2
        %v2056 = vmax.f32 %v2054, %v2055
        %v2057 = vrot.slane %v2056, 1
        %v2058 = vmax.f32 %v2056, %v2057
        %v2059 = vmax.f32 %v1935, %v1943
        %v2060 = vmax.f32 %v2059, %v1951
        %v2061 = vmax.f32 %v2060, %v1959
        %v2062 = vmax.f32 %v2061, %v1967
        %v2063 = vmax.f32 %v2062, %v1975
        %v2064 = vmax.f32 %v2063, %v1983
        %v2065 = vmax.f32 %v2064, %v1991
        %v2066 = vrot.slane %v2065, 4
        %v2067 = vmax.f32 %v2065, %v2066
        %v2068 = vrot.slane %v2067, 2
        %v2069 = vmax.f32 %v2067, %v2068
        %v2070 = vrot.slane %v2069, 1
        %v2071 = vmax.f32 %v2069, %v2070
        %v2072 = vmax.f32 %v1936, %v1944
        %v2073 = vmax.f32 %v2072, %v1952
        %v2074 = vmax.f32 %v2073, %v1960
        %v2075 = vmax.f32 %v2074, %v1968
        %v2076 = vmax.f32 %v2075, %v1976
        %v2077 = vmax.f32 %v2076, %v1984
        %v2078 = vmax.f32 %v2077, %v1992
        %v2079 = vrot.slane %v2078, 4
        %v2080 = vmax.f32 %v2078, %v2079
        %v2081 = vrot.slane %v2080, 2
        %v2082 = vmax.f32 %v2080, %v2081
        %v2083 = vrot.slane %v2082, 1
        %v2084 = vmax.f32 %v2082, %v2083
        %v2085 = vmax.f32 %v1937, %v1945
        %v2086 = vmax.f32 %v2085, %v1953
        %v2087 = vmax.f32 %v2086, %v1961
        %v2088 = vmax.f32 %v2087, %v1969
        %v2089 = vmax.f32 %v2088, %v1977
        %v2090 = vmax.f32 %v2089, %v1985
        %v2091 = vmax.f32 %v2090, %v1993
        %v2092 = vrot.slane %v2091, 4
        %v2093 = vmax.f32 %v2091, %v2092
        %v2094 = vrot.slane %v2093, 2
        %v2095 = vmax.f32 %v2093, %v2094
        %v2096 = vrot.slane %v2095, 1
        %v2097 = vmax.f32 %v2095, %v2096
        %vm2098 = vcmask 1040384
        %v2099 = vsel %vm2098, %v1401, %v2006
        %v2100 = vsel %vm2098, %v1414, %v2019
        %v2101 = vsel %vm2098, %v1427, %v2032
        %v2102 = vsel %vm2098, %v1440, %v2045
        %v2103 = vsel %vm2098, %v1453, %v2058
        %v2104 = vsel %vm2098, %v1466, %v2071
        %v2105 = vsel %vm2098, %v1479, %v2084
        %v2106 = vsel %vm2098, %v1492, %v2097
        %v2115 = vcombine.low %v2099, %v2100
        %v2116 = vcombine.low %v2101, %v2102
        %v2118 = vunpack.c.l.s4 1983009808
        %v2119 = vunpack.c.0.s8 %v2118
        %v2120 = vlaneseq
        %v2121 = vshrl.u32 %v2120, 7
        %v2122 = vsub.s32 %v2119, %v2121
        %v2123 = vrot.slane %v2115, %v2122
        %v2125 = vunpack.c.l.s4 1983009808
        %v2126 = vunpack.c.0.s8 %v2125
        %v2127 = vlaneseq
        %v2128 = vshrl.u32 %v2127, 7
        %v2129 = vsub.s32 %v2126, %v2128
        %v2130 = vrot.slane %v2116, %v2129
        %v2131 = vcombine.low %v2123, %v2130
        %v2132 = vcombine.low %v2103, %v2104
        %v2133 = vcombine.low %v2105, %v2106
        %v2135 = vunpack.c.l.s4 1983009808
        %v2136 = vunpack.c.0.s8 %v2135
        %v2137 = vlaneseq
        %v2138 = vshrl.u32 %v2137, 7
        %v2139 = vsub.s32 %v2136, %v2138
        %v2140 = vrot.slane %v2132, %v2139
        %v2142 = vunpack.c.l.s4 1983009808
        %v2143 = vunpack.c.0.s8 %v2142
        %v2144 = vlaneseq
        %v2145 = vshrl.u32 %v2144, 7
        %v2146 = vsub.s32 %v2143, %v2145
        %v2147 = vrot.slane %v2133, %v2146
        %v2148 = vcombine.low %v2140, %v2147
        %s2151 = smul.u32 %s20, 8
        %s2152 = smul.addr %s2151, 2
        %s2153 = scalar_lea.vmem %s419, %s2152
        %2154 = vst [vmem:[%s2153] sm:$0xff] %v2131
        %2155 = vst [vmem:[%s2153 + $0x8] sm:$0xff] %v2148
        %p2156 = scmp.eq.s32.totalorder %s20, 7
        // Predicated region
        $region60: #{primary_point_caps_forward.1} parent=54 // pred_check
          %p2157 = pneg %p2156
        $region61: #{primary_point_caps_forward.1} parent=54 // pred_check_branch
          %2159 = sbr.rel (%p2157) target = $region63
        $region62: #{primary_point_caps_forward.1} parent=54 // pred_region
          %v2160 = vld [vmem:[%s419] sm:$0xff]
          %v2161 = vld [vmem:[%s419 + $0x8] sm:$0xff]
          %v2162 = vld [vmem:[%s419 + $0x10] sm:$0xff]
          %v2163 = vld [vmem:[%s419 + $0x18] sm:$0xff]
          %v2164 = vld [vmem:[%s419 + $0x20] sm:$0xff]
          %v2165 = vld [vmem:[%s419 + $0x28] sm:$0xff]
          %v2166 = vld [vmem:[%s419 + $0x30] sm:$0xff]
          %v2167 = vld [vmem:[%s419 + $0x38] sm:$0xff]
          %v2168 = vld [vmem:[%s419 + $0x40] sm:$0xff]
          %v2169 = vld [vmem:[%s419 + $0x48] sm:$0xff]
          %v2170 = vld [vmem:[%s419 + $0x50] sm:$0xff]
          %v2171 = vld [vmem:[%s419 + $0x58] sm:$0xff]
          %v2172 = vld [vmem:[%s419 + $0x60] sm:$0xff]
          %v2173 = vld [vmem:[%s419 + $0x68] sm:$0xff]
          %v2174 = vld [vmem:[%s419 + $0x70] sm:$0xff]
          %v2175 = vld [vmem:[%s419 + $0x78] sm:$0xff]
          %v2176 = vmul.f32 %v2160, %v2160
          %v2177 = vmul.f32 %v2161, %v2161
          %v2178 = vmul.f32 %v2162, %v2162
          %v2179 = vmul.f32 %v2163, %v2163
          %v2180 = vmul.f32 %v2164, %v2164
          %v2181 = vmul.f32 %v2165, %v2165
          %v2182 = vmul.f32 %v2166, %v2166
          %v2183 = vmul.f32 %v2167, %v2167
          %v2184 = vmul.f32 %v2168, %v2168
          %v2185 = vmul.f32 %v2169, %v2169
          %v2186 = vmul.f32 %v2170, %v2170
          %v2187 = vmul.f32 %v2171, %v2171
          %v2188 = vmul.f32 %v2172, %v2172
          %v2189 = vmul.f32 %v2173, %v2173
          %v2190 = vmul.f32 %v2174, %v2174
          %v2191 = vmul.f32 %v2175, %v2175
          %v2208 = vcombine.high %v2176, %v2176
          %v2210 = vunpack.c.l.s4 1983009808
          %v2211 = vunpack.c.0.s8 %v2210
          %v2212 = vlaneseq
          %v2213 = vshrl.u32 %v2212, 7
          %v2214 = vsub.s32 %v2211, %v2213
          %v2215 = vrot.slane %v2176, %v2214
          %v2217 = vunpack.c.l.s4 1983009808
          %v2218 = vunpack.c.0.s8 %v2217
          %v2219 = vlaneseq
          %v2220 = vshrl.u32 %v2219, 7
          %v2221 = vsub.s32 %v2218, %v2220
          %v2222 = vrot.slane %v2208, %v2221
          %v2223 = vcombine.high %v2215, %v2215
          %v2224 = vcombine.high %v2222, %v2222
          %v2225 = vcombine.high %v2177, %v2177
          %v2227 = vunpack.c.l.s4 1983009808
          %v2228 = vunpack.c.0.s8 %v2227
          %v2229 = vlaneseq
          %v2230 = vshrl.u32 %v2229, 7
          %v2231 = vsub.s32 %v2228, %v2230
          %v2232 = vrot.slane %v2177, %v2231
          %v2234 = vunpack.c.l.s4 1983009808
          %v2235 = vunpack.c.0.s8 %v2234
          %v2236 = vlaneseq
          %v2237 = vshrl.u32 %v2236, 7
          %v2238 = vsub.s32 %v2235, %v2237
          %v2239 = vrot.slane %v2225, %v2238
          %v2240 = vcombine.high %v2232, %v2232
          %v2241 = vcombine.high %v2239, %v2239
          %v2242 = vcombine.high %v2178, %v2178
          %v2244 = vunpack.c.l.s4 1983009808
          %v2245 = vunpack.c.0.s8 %v2244
          %v2246 = vlaneseq
          %v2247 = vshrl.u32 %v2246, 7
          %v2248 = vsub.s32 %v2245, %v2247
          %v2249 = vrot.slane %v2178, %v2248
          %v2251 = vunpack.c.l.s4 1983009808
          %v2252 = vunpack.c.0.s8 %v2251
          %v2253 = vlaneseq
          %v2254 = vshrl.u32 %v2253, 7
          %v2255 = vsub.s32 %v2252, %v2254
          %v2256 = vrot.slane %v2242, %v2255
          %v2257 = vcombine.high %v2249, %v2249
          %v2258 = vcombine.high %v2256, %v2256
          %v2259 = vcombine.high %v2179, %v2179
          %v2261 = vunpack.c.l.s4 1983009808
          %v2262 = vunpack.c.0.s8 %v2261
          %v2263 = vlaneseq
          %v2264 = vshrl.u32 %v2263, 7
          %v2265 = vsub.s32 %v2262, %v2264
          %v2266 = vrot.slane %v2179, %v2265
          %v2268 = vunpack.c.l.s4 1983009808
          %v2269 = vunpack.c.0.s8 %v2268
          %v2270 = vlaneseq
          %v2271 = vshrl.u32 %v2270, 7
          %v2272 = vsub.s32 %v2269, %v2271
          %v2273 = vrot.slane %v2259, %v2272
          %v2274 = vcombine.high %v2266, %v2266
          %v2275 = vcombine.high %v2273, %v2273
          %v2276 = vcombine.high %v2180, %v2180
          %v2278 = vunpack.c.l.s4 1983009808
          %v2279 = vunpack.c.0.s8 %v2278
          %v2280 = vlaneseq
          %v2281 = vshrl.u32 %v2280, 7
          %v2282 = vsub.s32 %v2279, %v2281
          %v2283 = vrot.slane %v2180, %v2282
          %v2285 = vunpack.c.l.s4 1983009808
          %v2286 = vunpack.c.0.s8 %v2285
          %v2287 = vlaneseq
          %v2288 = vshrl.u32 %v2287, 7
          %v2289 = vsub.s32 %v2286, %v2288
          %v2290 = vrot.slane %v2276, %v2289
          %v2291 = vcombine.high %v2283, %v2283
          %v2292 = vcombine.high %v2290, %v2290
          %v2293 = vcombine.high %v2181, %v2181
          %v2295 = vunpack.c.l.s4 1983009808
          %v2296 = vunpack.c.0.s8 %v2295
          %v2297 = vlaneseq
          %v2298 = vshrl.u32 %v2297, 7
          %v2299 = vsub.s32 %v2296, %v2298
          %v2300 = vrot.slane %v2181, %v2299
          %v2302 = vunpack.c.l.s4 1983009808
          %v2303 = vunpack.c.0.s8 %v2302
          %v2304 = vlaneseq
          %v2305 = vshrl.u32 %v2304, 7
          %v2306 = vsub.s32 %v2303, %v2305
          %v2307 = vrot.slane %v2293, %v2306
          %v2308 = vcombine.high %v2300, %v2300
          %v2309 = vcombine.high %v2307, %v2307
          %v2310 = vcombine.high %v2182, %v2182
          %v2312 = vunpack.c.l.s4 1983009808
          %v2313 = vunpack.c.0.s8 %v2312
          %v2314 = vlaneseq
          %v2315 = vshrl.u32 %v2314, 7
          %v2316 = vsub.s32 %v2313, %v2315
          %v2317 = vrot.slane %v2182, %v2316
          %v2319 = vunpack.c.l.s4 1983009808
          %v2320 = vunpack.c.0.s8 %v2319
          %v2321 = vlaneseq
          %v2322 = vshrl.u32 %v2321, 7
          %v2323 = vsub.s32 %v2320, %v2322
          %v2324 = vrot.slane %v2310, %v2323
          %v2325 = vcombine.high %v2317, %v2317
          %v2326 = vcombine.high %v2324, %v2324
          %v2327 = vcombine.high %v2183, %v2183
          %v2329 = vunpack.c.l.s4 1983009808
          %v2330 = vunpack.c.0.s8 %v2329
          %v2331 = vlaneseq
          %v2332 = vshrl.u32 %v2331, 7
          %v2333 = vsub.s32 %v2330, %v2332
          %v2334 = vrot.slane %v2183, %v2333
          %v2336 = vunpack.c.l.s4 1983009808
          %v2337 = vunpack.c.0.s8 %v2336
          %v2338 = vlaneseq
          %v2339 = vshrl.u32 %v2338, 7
          %v2340 = vsub.s32 %v2337, %v2339
          %v2341 = vrot.slane %v2327, %v2340
          %v2342 = vcombine.high %v2334, %v2334
          %v2343 = vcombine.high %v2341, %v2341
          %v2344 = vcombine.high %v2184, %v2184
          %v2346 = vunpack.c.l.s4 1983009808
          %v2347 = vunpack.c.0.s8 %v2346
          %v2348 = vlaneseq
          %v2349 = vshrl.u32 %v2348, 7
          %v2350 = vsub.s32 %v2347, %v2349
          %v2351 = vrot.slane %v2184, %v2350
          %v2353 = vunpack.c.l.s4 1983009808
          %v2354 = vunpack.c.0.s8 %v2353
          %v2355 = vlaneseq
          %v2356 = vshrl.u32 %v2355, 7
          %v2357 = vsub.s32 %v2354, %v2356
          %v2358 = vrot.slane %v2344, %v2357
          %v2359 = vcombine.high %v2351, %v2351
          %v2360 = vcombine.high %v2358, %v2358
          %v2361 = vcombine.high %v2185, %v2185
          %v2363 = vunpack.c.l.s4 1983009808
          %v2364 = vunpack.c.0.s8 %v2363
          %v2365 = vlaneseq
          %v2366 = vshrl.u32 %v2365, 7
          %v2367 = vsub.s32 %v2364, %v2366
          %v2368 = vrot.slane %v2185, %v2367
          %v2370 = vunpack.c.l.s4 1983009808
          %v2371 = vunpack.c.0.s8 %v2370
          %v2372 = vlaneseq
          %v2373 = vshrl.u32 %v2372, 7
          %v2374 = vsub.s32 %v2371, %v2373
          %v2375 = vrot.slane %v2361, %v2374
          %v2376 = vcombine.high %v2368, %v2368
          %v2377 = vcombine.high %v2375, %v2375
          %v2378 = vcombine.high %v2186, %v2186
          %v2380 = vunpack.c.l.s4 1983009808
          %v2381 = vunpack.c.0.s8 %v2380
          %v2382 = vlaneseq
          %v2383 = vshrl.u32 %v2382, 7
          %v2384 = vsub.s32 %v2381, %v2383
          %v2385 = vrot.slane %v2186, %v2384
          %v2387 = vunpack.c.l.s4 1983009808
          %v2388 = vunpack.c.0.s8 %v2387
          %v2389 = vlaneseq
          %v2390 = vshrl.u32 %v2389, 7
          %v2391 = vsub.s32 %v2388, %v2390
          %v2392 = vrot.slane %v2378, %v2391
          %v2393 = vcombine.high %v2385, %v2385
          %v2394 = vcombine.high %v2392, %v2392
          %v2395 = vcombine.high %v2187, %v2187
          %v2397 = vunpack.c.l.s4 1983009808
          %v2398 = vunpack.c.0.s8 %v2397
          %v2399 = vlaneseq
          %v2400 = vshrl.u32 %v2399, 7
          %v2401 = vsub.s32 %v2398, %v2400
          %v2402 = vrot.slane %v2187, %v2401
          %v2404 = vunpack.c.l.s4 1983009808
          %v2405 = vunpack.c.0.s8 %v2404
          %v2406 = vlaneseq
          %v2407 = vshrl.u32 %v2406, 7
          %v2408 = vsub.s32 %v2405, %v2407
          %v2409 = vrot.slane %v2395, %v2408
          %v2410 = vcombine.high %v2402, %v2402
          %v2411 = vcombine.high %v2409, %v2409
          %v2412 = vcombine.high %v2188, %v2188
          %v2414 = vunpack.c.l.s4 1983009808
          %v2415 = vunpack.c.0.s8 %v2414
          %v2416 = vlaneseq
          %v2417 = vshrl.u32 %v2416, 7
          %v2418 = vsub.s32 %v2415, %v2417
          %v2419 = vrot.slane %v2188, %v2418
          %v2421 = vunpack.c.l.s4 1983009808
          %v2422 = vunpack.c.0.s8 %v2421
          %v2423 = vlaneseq
          %v2424 = vshrl.u32 %v2423, 7
          %v2425 = vsub.s32 %v2422, %v2424
          %v2426 = vrot.slane %v2412, %v2425
          %v2427 = vcombine.high %v2419, %v2419
          %v2428 = vcombine.high %v2426, %v2426
          %v2429 = vcombine.high %v2189, %v2189
          %v2431 = vunpack.c.l.s4 1983009808
          %v2432 = vunpack.c.0.s8 %v2431
          %v2433 = vlaneseq
          %v2434 = vshrl.u32 %v2433, 7
          %v2435 = vsub.s32 %v2432, %v2434
          %v2436 = vrot.slane %v2189, %v2435
          %v2438 = vunpack.c.l.s4 1983009808
          %v2439 = vunpack.c.0.s8 %v2438
          %v2440 = vlaneseq
          %v2441 = vshrl.u32 %v2440, 7
          %v2442 = vsub.s32 %v2439, %v2441
          %v2443 = vrot.slane %v2429, %v2442
          %v2444 = vcombine.high %v2436, %v2436
          %v2445 = vcombine.high %v2443, %v2443
          %v2446 = vcombine.high %v2190, %v2190
          %v2448 = vunpack.c.l.s4 1983009808
          %v2449 = vunpack.c.0.s8 %v2448
          %v2450 = vlaneseq
          %v2451 = vshrl.u32 %v2450, 7
          %v2452 = vsub.s32 %v2449, %v2451
          %v2453 = vrot.slane %v2190, %v2452
          %v2455 = vunpack.c.l.s4 1983009808
          %v2456 = vunpack.c.0.s8 %v2455
          %v2457 = vlaneseq
          %v2458 = vshrl.u32 %v2457, 7
          %v2459 = vsub.s32 %v2456, %v2458
          %v2460 = vrot.slane %v2446, %v2459
          %v2461 = vcombine.high %v2453, %v2453
          %v2462 = vcombine.high %v2460, %v2460
          %v2463 = vcombine.high %v2191, %v2191
          %v2465 = vunpack.c.l.s4 1983009808
          %v2466 = vunpack.c.0.s8 %v2465
          %v2467 = vlaneseq
          %v2468 = vshrl.u32 %v2467, 7
          %v2469 = vsub.s32 %v2466, %v2468
          %v2470 = vrot.slane %v2191, %v2469
          %v2472 = vunpack.c.l.s4 1983009808
          %v2473 = vunpack.c.0.s8 %v2472
          %v2474 = vlaneseq
          %v2475 = vshrl.u32 %v2474, 7
          %v2476 = vsub.s32 %v2473, %v2475
          %v2477 = vrot.slane %v2463, %v2476
          %v2478 = vcombine.high %v2470, %v2470
          %v2479 = vcombine.high %v2477, %v2477
          %vm2544 = vcmask 1041408
          %v2545 = vsel %vm2544, %v2215, 0.0
          %v2546 = vsel %vm2544, %v2249, 0.0
          %v2547 = vadd.f32 %v2545, %v2546
          %v2548 = vsel %vm2544, %v2283, 0.0
          %v2549 = vadd.f32 %v2547, %v2548
          %v2550 = vsel %vm2544, %v2317, 0.0
          %v2551 = vadd.f32 %v2549, %v2550
          %v2552 = vsel %vm2544, %v2351, 0.0
          %v2553 = vadd.f32 %v2551, %v2552
          %v2554 = vsel %vm2544, %v2385, 0.0
          %v2555 = vadd.f32 %v2553, %v2554
          %v2556 = vsel %vm2544, %v2419, 0.0
          %v2557 = vadd.f32 %v2555, %v2556
          %v2558 = vsel %vm2544, %v2453, 0.0
          %v2559 = vadd.f32 %v2557, %v2558
          %v2560 = vsel %vm2544, %v2223, 0.0
          %v2561 = vsel %vm2544, %v2257, 0.0
          %v2562 = vadd.f32 %v2560, %v2561
          %v2563 = vsel %vm2544, %v2291, 0.0
          %v2564 = vadd.f32 %v2562, %v2563
          %v2565 = vsel %vm2544, %v2325, 0.0
          %v2566 = vadd.f32 %v2564, %v2565
          %v2567 = vsel %vm2544, %v2359, 0.0
          %v2568 = vadd.f32 %v2566, %v2567
          %v2569 = vsel %vm2544, %v2393, 0.0
          %v2570 = vadd.f32 %v2568, %v2569
          %v2571 = vsel %vm2544, %v2427, 0.0
          %v2572 = vadd.f32 %v2570, %v2571
          %v2573 = vsel %vm2544, %v2461, 0.0
          %v2574 = vadd.f32 %v2572, %v2573
          %v2575 = vsel %vm2544, %v2222, 0.0
          %v2576 = vsel %vm2544, %v2256, 0.0
          %v2577 = vadd.f32 %v2575, %v2576
          %v2578 = vsel %vm2544, %v2290, 0.0
          %v2579 = vadd.f32 %v2577, %v2578
          %v2580 = vsel %vm2544, %v2324, 0.0
          %v2581 = vadd.f32 %v2579, %v2580
          %v2582 = vsel %vm2544, %v2358, 0.0
          %v2583 = vadd.f32 %v2581, %v2582
          %v2584 = vsel %vm2544, %v2392, 0.0
          %v2585 = vadd.f32 %v2583, %v2584
          %v2586 = vsel %vm2544, %v2426, 0.0
          %v2587 = vadd.f32 %v2585, %v2586
          %v2588 = vsel %vm2544, %v2460, 0.0
          %v2589 = vadd.f32 %v2587, %v2588
          %v2590 = vsel %vm2544, %v2224, 0.0
          %v2591 = vsel %vm2544, %v2258, 0.0
          %v2592 = vadd.f32 %v2590, %v2591
          %v2593 = vsel %vm2544, %v2292, 0.0
          %v2594 = vadd.f32 %v2592, %v2593
          %v2595 = vsel %vm2544, %v2326, 0.0
          %v2596 = vadd.f32 %v2594, %v2595
          %v2597 = vsel %vm2544, %v2360, 0.0
          %v2598 = vadd.f32 %v2596, %v2597
          %v2599 = vsel %vm2544, %v2394, 0.0
          %v2600 = vadd.f32 %v2598, %v2599
          %v2601 = vsel %vm2544, %v2428, 0.0
          %v2602 = vadd.f32 %v2600, %v2601
          %v2603 = vsel %vm2544, %v2462, 0.0
          %v2604 = vadd.f32 %v2602, %v2603
          %v2605 = vsel %vm2544, %v2232, 0.0
          %v2606 = vsel %vm2544, %v2266, 0.0
          %v2607 = vadd.f32 %v2605, %v2606
          %v2608 = vsel %vm2544, %v2300, 0.0
          %v2609 = vadd.f32 %v2607, %v2608
          %v2610 = vsel %vm2544, %v2334, 0.0
          %v2611 = vadd.f32 %v2609, %v2610
          %v2612 = vsel %vm2544, %v2368, 0.0
          %v2613 = vadd.f32 %v2611, %v2612
          %v2614 = vsel %vm2544, %v2402, 0.0
          %v2615 = vadd.f32 %v2613, %v2614
          %v2616 = vsel %vm2544, %v2436, 0.0
          %v2617 = vadd.f32 %v2615, %v2616
          %v2618 = vsel %vm2544, %v2470, 0.0
          %v2619 = vadd.f32 %v2617, %v2618
          %v2620 = vsel %vm2544, %v2240, 0.0
          %v2621 = vsel %vm2544, %v2274, 0.0
          %v2622 = vadd.f32 %v2620, %v2621
          %v2623 = vsel %vm2544, %v2308, 0.0
          %v2624 = vadd.f32 %v2622, %v2623
          %v2625 = vsel %vm2544, %v2342, 0.0
          %v2626 = vadd.f32 %v2624, %v2625
          %v2627 = vsel %vm2544, %v2376, 0.0
          %v2628 = vadd.f32 %v2626, %v2627
          %v2629 = vsel %vm2544, %v2410, 0.0
          %v2630 = vadd.f32 %v2628, %v2629
          %v2631 = vsel %vm2544, %v2444, 0.0
          %v2632 = vadd.f32 %v2630, %v2631
          %v2633 = vsel %vm2544, %v2478, 0.0
          %v2634 = vadd.f32 %v2632, %v2633
          %v2635 = vsel %vm2544, %v2239, 0.0
          %v2636 = vsel %vm2544, %v2273, 0.0
          %v2637 = vadd.f32 %v2635, %v2636
          %v2638 = vsel %vm2544, %v2307, 0.0
          %v2639 = vadd.f32 %v2637, %v2638
          %v2640 = vsel %vm2544, %v2341, 0.0
          %v2641 = vadd.f32 %v2639, %v2640
          %v2642 = vsel %vm2544, %v2375, 0.0
          %v2643 = vadd.f32 %v2641, %v2642
          %v2644 = vsel %vm2544, %v2409, 0.0
          %v2645 = vadd.f32 %v2643, %v2644
          %v2646 = vsel %vm2544, %v2443, 0.0
          %v2647 = vadd.f32 %v2645, %v2646
          %v2648 = vsel %vm2544, %v2477, 0.0
          %v2649 = vadd.f32 %v2647, %v2648
          %v2650 = vsel %vm2544, %v2241, 0.0
          %v2651 = vsel %vm2544, %v2275, 0.0
          %v2652 = vadd.f32 %v2650, %v2651
          %v2653 = vsel %vm2544, %v2309, 0.0
          %v2654 = vadd.f32 %v2652, %v2653
          %v2655 = vsel %vm2544, %v2343, 0.0
          %v2656 = vadd.f32 %v2654, %v2655
          %v2657 = vsel %vm2544, %v2377, 0.0
          %v2658 = vadd.f32 %v2656, %v2657
          %v2659 = vsel %vm2544, %v2411, 0.0
          %v2660 = vadd.f32 %v2658, %v2659
          %v2661 = vsel %vm2544, %v2445, 0.0
          %v2662 = vadd.f32 %v2660, %v2661
          %v2663 = vsel %vm2544, %v2479, 0.0
          %v2664 = vadd.f32 %v2662, %v2663
          %v2665 = vrsqrt.pop %v2559
          %v2666 = vmul.f32 %v2559, %v2665
          %vm2667 = vcmp.eq.f32.partialorder %v2559, inf
          %v2668 = vsel %vm2667, %v2559, %v2666
          %vm2669 = vcmp.eq.f32.partialorder %v2559, 0.0
          %v2670 = vand.u32 %v2559, 2147483648
          %v2671 = vsel %vm2669, %v2670, %v2668
          %v2672 = vrsqrt.pop %v2574
          %v2673 = vmul.f32 %v2574, %v2672
          %vm2674 = vcmp.eq.f32.partialorder %v2574, inf
          %v2675 = vsel %vm2674, %v2574, %v2673
          %vm2676 = vcmp.eq.f32.partialorder %v2574, 0.0
          %v2677 = vand.u32 %v2574, 2147483648
          %v2678 = vsel %vm2676, %v2677, %v2675
          %v2679 = vrsqrt.pop %v2589
          %v2680 = vmul.f32 %v2589, %v2679
          %vm2681 = vcmp.eq.f32.partialorder %v2589, inf
          %v2682 = vsel %vm2681, %v2589, %v2680
          %vm2683 = vcmp.eq.f32.partialorder %v2589, 0.0
          %v2684 = vand.u32 %v2589, 2147483648
          %v2685 = vsel %vm2683, %v2684, %v2682
          %v2686 = vrsqrt.pop %v2604
          %v2687 = vmul.f32 %v2604, %v2686
          %vm2688 = vcmp.eq.f32.partialorder %v2604, inf
          %v2689 = vsel %vm2688, %v2604, %v2687
          %vm2690 = vcmp.eq.f32.partialorder %v2604, 0.0
          %v2691 = vand.u32 %v2604, 2147483648
          %v2692 = vsel %vm2690, %v2691, %v2689
          %v2693 = vrsqrt.pop %v2619
          %v2694 = vmul.f32 %v2619, %v2693
          %vm2695 = vcmp.eq.f32.partialorder %v2619, inf
          %v2696 = vsel %vm2695, %v2619, %v2694
          %vm2697 = vcmp.eq.f32.partialorder %v2619, 0.0
          %v2698 = vand.u32 %v2619, 2147483648
          %v2699 = vsel %vm2697, %v2698, %v2696
          %v2700 = vrsqrt.pop %v2634
          %v2701 = vmul.f32 %v2634, %v2700
          %vm2702 = vcmp.eq.f32.partialorder %v2634, inf
          %v2703 = vsel %vm2702, %v2634, %v2701
          %vm2704 = vcmp.eq.f32.partialorder %v2634, 0.0
          %v2705 = vand.u32 %v2634, 2147483648
          %v2706 = vsel %vm2704, %v2705, %v2703
          %v2707 = vrsqrt.pop %v2649
          %v2708 = vmul.f32 %v2649, %v2707
          %vm2709 = vcmp.eq.f32.partialorder %v2649, inf
          %v2710 = vsel %vm2709, %v2649, %v2708
          %vm2711 = vcmp.eq.f32.partialorder %v2649, 0.0
          %v2712 = vand.u32 %v2649, 2147483648
          %v2713 = vsel %vm2711, %v2712, %v2710
          %v2714 = vrsqrt.pop %v2664
          %v2715 = vmul.f32 %v2664, %v2714
          %vm2716 = vcmp.eq.f32.partialorder %v2664, inf
          %v2717 = vsel %vm2716, %v2664, %v2715
          %vm2718 = vcmp.eq.f32.partialorder %v2664, 0.0
          %v2719 = vand.u32 %v2664, 2147483648
          %v2720 = vsel %vm2718, %v2719, %v2717
          %v2729 = vcombine.low %v2671, %v2678
          %v2730 = vcombine.low %v2685, %v2692
          %v2732 = vunpack.c.l.s4 1983009808
          %v2733 = vunpack.c.0.s8 %v2732
          %v2734 = vlaneseq
          %v2735 = vshrl.u32 %v2734, 7
          %v2736 = vsub.s32 %v2733, %v2735
          %v2737 = vrot.slane %v2729, %v2736
          %v2739 = vunpack.c.l.s4 1983009808
          %v2740 = vunpack.c.0.s8 %v2739
          %v2741 = vlaneseq
          %v2742 = vshrl.u32 %v2741, 7
          %v2743 = vsub.s32 %v2740, %v2742
          %v2744 = vrot.slane %v2730, %v2743
          %v2745 = vcombine.low %v2737, %v2744
          %v2746 = vcombine.low %v2699, %v2706
          %v2747 = vcombine.low %v2713, %v2720
          %v2749 = vunpack.c.l.s4 1983009808
          %v2750 = vunpack.c.0.s8 %v2749
          %v2751 = vlaneseq
          %v2752 = vshrl.u32 %v2751, 7
          %v2753 = vsub.s32 %v2750, %v2752
          %v2754 = vrot.slane %v2746, %v2753
          %v2756 = vunpack.c.l.s4 1983009808
          %v2757 = vunpack.c.0.s8 %v2756
          %v2758 = vlaneseq
          %v2759 = vshrl.u32 %v2758, 7
          %v2760 = vsub.s32 %v2757, %v2759
          %v2761 = vrot.slane %v2747, %v2760
          %v2762 = vcombine.low %v2754, %v2761
          %v2765 = vmul.f32 %v2160, %v2745
          %v2766 = vmul.f32 %v2161, %v2762
          %v2767 = vmul.f32 %v2162, %v2745
          %v2768 = vmul.f32 %v2163, %v2762
          %v2769 = vmul.f32 %v2164, %v2745
          %v2770 = vmul.f32 %v2165, %v2762
          %v2771 = vmul.f32 %v2166, %v2745
          %v2772 = vmul.f32 %v2167, %v2762
          %v2773 = vmul.f32 %v2168, %v2745
          %v2774 = vmul.f32 %v2169, %v2762
          %v2775 = vmul.f32 %v2170, %v2745
          %v2776 = vmul.f32 %v2171, %v2762
          %v2777 = vmul.f32 %v2172, %v2745
          %v2778 = vmul.f32 %v2173, %v2762
          %v2779 = vmul.f32 %v2174, %v2745
          %v2780 = vmul.f32 %v2175, %v2762
          %v2781 = vadd.f32 %v2559, 1.0
          %v2782 = vadd.f32 %v2574, 1.0
          %v2783 = vadd.f32 %v2589, 1.0
          %v2784 = vadd.f32 %v2604, 1.0
          %v2785 = vadd.f32 %v2619, 1.0
          %v2786 = vadd.f32 %v2634, 1.0
          %v2787 = vadd.f32 %v2649, 1.0
          %v2788 = vadd.f32 %v2664, 1.0
          %v2789 = vrcp.pop %v2781
          %v2790 = vrcp.pop %v2782
          %v2791 = vrcp.pop %v2783
          %v2792 = vrcp.pop %v2784
          %v2793 = vrcp.pop %v2785
          %v2794 = vrcp.pop %v2786
          %v2795 = vrcp.pop %v2787
          %v2796 = vrcp.pop %v2788
          %v2805 = vcombine.low %v2789, %v2790
          %v2806 = vcombine.low %v2791, %v2792
          %v2808 = vunpack.c.l.s4 1983009808
          %v2809 = vunpack.c.0.s8 %v2808
          %v2810 = vlaneseq
          %v2811 = vshrl.u32 %v2810, 7
          %v2812 = vsub.s32 %v2809, %v2811
          %v2813 = vrot.slane %v2805, %v2812
          %v2815 = vunpack.c.l.s4 1983009808
          %v2816 = vunpack.c.0.s8 %v2815
          %v2817 = vlaneseq
          %v2818 = vshrl.u32 %v2817, 7
          %v2819 = vsub.s32 %v2816, %v2818
          %v2820 = vrot.slane %v2806, %v2819
          %v2821 = vcombine.low %v2813, %v2820
          %v2822 = vcombine.low %v2793, %v2794
          %v2823 = vcombine.low %v2795, %v2796
          %v2825 = vunpack.c.l.s4 1983009808
          %v2826 = vunpack.c.0.s8 %v2825
          %v2827 = vlaneseq
          %v2828 = vshrl.u32 %v2827, 7
          %v2829 = vsub.s32 %v2826, %v2828
          %v2830 = vrot.slane %v2822, %v2829
          %v2832 = vunpack.c.l.s4 1983009808
          %v2833 = vunpack.c.0.s8 %v2832
          %v2834 = vlaneseq
          %v2835 = vshrl.u32 %v2834, 7
          %v2836 = vsub.s32 %v2833, %v2835
          %v2837 = vrot.slane %v2823, %v2836
          %v2838 = vcombine.low %v2830, %v2837
          %v2841 = vmul.f32 %v2765, %v2821
          %v2842 = vmul.f32 %v2766, %v2838
          %v2843 = vmul.f32 %v2767, %v2821
          %v2844 = vmul.f32 %v2768, %v2838
          %v2845 = vmul.f32 %v2769, %v2821
          %v2846 = vmul.f32 %v2770, %v2838
          %v2847 = vmul.f32 %v2771, %v2821
          %v2848 = vmul.f32 %v2772, %v2838
          %v2849 = vmul.f32 %v2773, %v2821
          %v2850 = vmul.f32 %v2774, %v2838
          %v2851 = vmul.f32 %v2775, %v2821
          %v2852 = vmul.f32 %v2776, %v2838
          %v2853 = vmul.f32 %v2777, %v2821
          %v2854 = vmul.f32 %v2778, %v2838
          %v2855 = vmul.f32 %v2779, %v2821
          %v2856 = vmul.f32 %v2780, %v2838
          %2857 = vst [vmem:[%s419] sm:$0xff] %v2841
          %2858 = vst [vmem:[%s419 + $0x8] sm:$0xff] %v2842
          %2859 = vst [vmem:[%s419 + $0x10] sm:$0xff] %v2843
          %2860 = vst [vmem:[%s419 + $0x18] sm:$0xff] %v2844
          %2861 = vst [vmem:[%s419 + $0x20] sm:$0xff] %v2845
          %2862 = vst [vmem:[%s419 + $0x28] sm:$0xff] %v2846
          %2863 = vst [vmem:[%s419 + $0x30] sm:$0xff] %v2847
          %2864 = vst [vmem:[%s419 + $0x38] sm:$0xff] %v2848
          %2865 = vst [vmem:[%s419 + $0x40] sm:$0xff] %v2849
          %2866 = vst [vmem:[%s419 + $0x48] sm:$0xff] %v2850
          %2867 = vst [vmem:[%s419 + $0x50] sm:$0xff] %v2851
          %2868 = vst [vmem:[%s419 + $0x58] sm:$0xff] %v2852
          %2869 = vst [vmem:[%s419 + $0x60] sm:$0xff] %v2853
          %2870 = vst [vmem:[%s419 + $0x68] sm:$0xff] %v2854
          %2871 = vst [vmem:[%s419 + $0x70] sm:$0xff] %v2855
          %2872 = vst [vmem:[%s419 + $0x78] sm:$0xff] %v2856
        $region63: #{primary_point_caps_forward.1} parent=54 // pred_fallthru
          _
        %p2873 = scmp.lt.s32.totalorder %s19, 0
        %s2874 = scalar_select %p2873, %s19, 0
        %s2875 = smul.addr %s2874, 8
        %s2876 = smul.addr %s2875, 2
        %s2877 = scalar_lea.vmem %s4, %s2876
        // Predicated region
        $region64: #{primary_point_caps_forward.1} parent=54 // pred_check
          %p2878 = pneg %p149
        $region65: #{primary_point_caps_forward.1} parent=54 // pred_check_branch
          %2880 = sbr.rel (%p2878) target = $region67
        $region66: #{primary_point_caps_forward.1} parent=54 // pred_region
          _
        $region67: #{primary_point_caps_forward.1} parent=54 // pred_fallthru
          _
        // Predicated region
        $region68: #{primary_point_caps_forward.1} parent=54 // pred_check
          %p2881 = pneg %p149
        $region69: #{primary_point_caps_forward.1} parent=54 // pred_check_branch
          %2883 = sbr.rel (%p2881) target = $region71
        $region70: #{primary_point_caps_forward.1} parent=54 // pred_region
          %p2884 = scmp.lt.s32.totalorder %s19, 0
          %s2885 = scalar_select %p2884, %s19, 0
          %s2886 = smul.addr %s2885, 8
          %s2887 = smul.addr %s2886, 2
          %s2888 = scalar_lea.vmem %s4, %s2887
        $region71: #{primary_point_caps_forward.1} parent=54 // pred_fallthru
          _
      $region55: #{primary_point_caps_forward.1} parent=5 // pred_fallthru
        _
      %p2889 = scmp.le.s32.totalorder 2, %s10
      // Predicated region
      $region72: #{primary_point_caps_forward.1} parent=5 // pred_check
        %p2890 = pneg %p2889
      $region73: #{primary_point_caps_forward.1} parent=5 // pred_check_branch
        %2892 = sbr.rel (%p2890) target = $region75
      $region74: #{primary_point_caps_forward.1} parent=5 // pred_region
        %s2893 = ssub.s32 %s10, 2
      $region75: #{primary_point_caps_forward.1} parent=5 // pred_fallthru
        _
    $region6: #{primary_point_caps_forward.1} parent=1 // loop_footer
      %s14 = sadd.s32 1, %s10
    $region7: #{primary_point_caps_forward.1} parent=1 // loop_footer_branch
      %9 = sbr.rel target = $region3
    $region8: #{primary_point_caps_forward.1} parent=1 // loop_exit
      _

</llo_original>
